<compile_context>
chip_gen: v7x
topology: tpu7x:2x2x1
jax: 0.10.0
libtpu: 0.0.40
codegen_flags: <defaults>
</compile_context>

<pallas_src>
import jax
import jax.numpy as jnp
from jax.experimental import pallas as pl
from jax.experimental.pallas import tpu as pltpu

# ----------------------------- configuration -------------------------------
B = 2                  # batch
S = 8                  # sequence length
D = 32                 # model dim
NUM_HEADS_INNER = 4    # heads inside each MultiHeadAttention
HD = D // NUM_HEADS_INNER
N_LAYERS = 2           # == `n_heads` arg of Encoder (number of MHA layers)
SCALE = HD ** -0.5


# ------------------------------ Pallas kernel ------------------------------
def encoder_kernel(x_ref, wqkv_ref, wo_ref, o_ref, h_ref):
    """One grid step == one MultiHeadAttention layer.

    Refs:
      x_ref   : (B, S, D)        input (same block every step; read at step 0)
      wqkv_ref: (1, D, 3*D)      this layer's fused [Wq | Wk | Wv]
      wo_ref  : (1, D, D)        this layer's output projection
      o_ref   : (B, S, D)        output (written on the last step)
      h_ref   : (B*S, D) VMEM    running activation carried across grid steps
    """
    layer = pl.program_id(0)

    @pl.when(layer == 0)
    def _init():
        h_ref[...] = x_ref[...].reshape(B * S, D).astype(jnp.float32)

    h = h_ref[...]                        # (B*S, D)
    wqkv = wqkv_ref[0]                    # (D, 3D)
    wo = wo_ref[0]                        # (D, D)

    # One fused projection matmul per layer; fold 1/sqrt(HD) into q.
    qkv = jnp.dot(h, wqkv, preferred_element_type=jnp.float32)   # (B*S, 3D)
    q = qkv[:, :D] * SCALE
    k = qkv[:, D:2 * D]
    v = qkv[:, 2 * D:]

    head_ctx = []
    for hi in range(NUM_HEADS_INNER):     # static unroll (4 heads)
        lo = hi * HD
        qh = q[:, lo:lo + HD].reshape(B, S, HD)
        kh = k[:, lo:lo + HD].reshape(B, S, HD)
        vh = v[:, lo:lo + HD].reshape(B, S, HD)

        # Single leading batch dim; contracts last dims (no explicit kh.T).
        s = jnp.einsum('bqd,bkd->bqk', qh, kh,
                       preferred_element_type=jnp.float32)        # (B, S, S)
        m = jnp.max(s, axis=-1, keepdims=True)
        e = jnp.exp(s - m)
        p = e / jnp.sum(e, axis=-1, keepdims=True)                # exact softmax
        ctx = jnp.einsum('bqk,bkd->bqd', p, vh,
                         preferred_element_type=jnp.float32)      # (B, S, HD)
        head_ctx.append(ctx.reshape(B * S, HD))

    ctx_all = jnp.concatenate(head_ctx, axis=-1)                  # (B*S, D)
    h_new = jnp.dot(ctx_all, wo, preferred_element_type=jnp.float32)
    h_ref[...] = h_new                    # carry to next layer

    @pl.when(layer == pl.num_programs(0) - 1)
    def _finalize():
        o_ref[...] = h_new.reshape(B, S, D).astype(o_ref.dtype)


# ------------------------------ wrapper -------------------------------------
@jax.jit
def encoder_forward(x, wqkv_all, wo_all):
    """Fused Encoder forward.

    x: (B, S, D); wqkv_all: (N_LAYERS, D, 3*D); wo_all: (N_LAYERS, D, D)."""
    grid_spec = pltpu.PrefetchScalarGridSpec(
        num_scalar_prefetch=0,
        grid=(N_LAYERS,),
        in_specs=[
            pl.BlockSpec((B, S, D), lambda l: (0, 0, 0)),        # input
            pl.BlockSpec((1, D, 3 * D), lambda l: (l, 0, 0)),    # fused QKV
            pl.BlockSpec((1, D, D), lambda l: (l, 0, 0)),        # out proj
        ],
        out_specs=pl.BlockSpec((B, S, D), lambda l: (0, 0, 0)),
        scratch_shapes=[pltpu.VMEM((B * S, D), jnp.float32)],
    )
    return pl.pallas_call(
        encoder_kernel,
        out_shape=jax.ShapeDtypeStruct((B, S, D), x.dtype),
        grid_spec=grid_spec,
        compiler_params=pltpu.CompilerParams(
            dimension_semantics=("arbitrary",)),   # activation carried across layers
    )(x, wqkv_all, wo_all)


# ------------------------- pure-JAX reference --------------------------------
def mha_ref(x, wq, wk, wv, wo):
    q = x @ wq
    k = x @ wk
    v = x @ wv
    qh = q.reshape(B, S, NUM_HEADS_INNER, HD).transpose(0, 2, 1, 3)
    kh = k.reshape(B, S, NUM_HEADS_INNER, HD).transpose(0, 2, 1, 3)
    vh = v.reshape(B, S, NUM_HEADS_INNER, HD).transpose(0, 2, 1, 3)
    scores = jnp.einsum("bhqd,bhkd->bhqk", qh, kh) * SCALE
    p = jax.nn.softmax(scores, axis=-1)
    ctx = jnp.einsum("bhqk,bhkd->bhqd", p, vh)
    ctx = ctx.transpose(0, 2, 1, 3).reshape(B, S, D)
    return ctx @ wo


def encoder_ref(x, wq_all, wk_all, wv_all, wo_all):
    h = x
    for i in range(N_LAYERS):
        h = mha_ref(h, wq_all[i], wk_all[i], wv_all[i], wo_all[i])
    return h


# ------------------------------- main ----------------------------------------
if __name__ == "__main__":
    key = jax.random.PRNGKey(0)
    kx, kp = jax.random.split(key)

    x = jax.random.normal(kx, (B, S, D), jnp.float32)

    std = 1.0 / (D ** 0.5)
    wqs, wks, wvs, wos = [], [], [], []
    for i in range(N_LAYERS):
        kl = jax.random.fold_in(kp, i)
        kq, kk, kv, ko = jax.random.split(kl, 4)
        wqs.append(jax.random.normal(kq, (D, D), jnp.float32) * std)
        wks.append(jax.random.normal(kk, (D, D), jnp.float32) * std)
        wvs.append(jax.random.normal(kv, (D, D), jnp.float32) * std)
        wos.append(jax.random.normal(ko, (D, D), jnp.float32) * std)
    wq_all = jnp.stack(wqs)
    wk_all = jnp.stack(wks)
    wv_all = jnp.stack(wvs)
    wo_all = jnp.stack(wos)
    # Fused per-layer QKV weight: (N_LAYERS, D, 3D), columns = [Wq | Wk | Wv].
    wqkv_all = jnp.concatenate([wq_all, wk_all, wv_all], axis=-1)

    out = jax.block_until_ready(encoder_forward(x, wqkv_all, wo_all))

    # Full-f32 reference (avoid XLA's default low-precision matmul passes so
    # the comparison against the kernel's f32 MXU matmuls is tight).
    with jax.default_matmul_precision("highest"):
        ref = encoder_ref(x, wq_all, wk_all, wv_all, wo_all)

    assert out.shape == (B, S, D)
    max_err = float(jnp.max(jnp.abs(out - ref)))
    assert jnp.allclose(out, ref, atol=5e-4, rtol=5e-4), (
        f"kernel mismatch vs reference; max abs err = {max_err}")
    print("KERNEL_OK")
</pallas_src>

<mosaic_0001>
module attributes {stable_mosaic.version = 11 : i64} {
  func.func @encoder_kernel(%arg0: i32, %arg1: memref<2x8x32xf32, #tpu.memory_space<vmem>>, %arg2: memref<1x32x96xf32, #tpu.memory_space<vmem>>, %arg3: memref<1x32x32xf32, #tpu.memory_space<vmem>>, %arg4: memref<2x8x32xf32, #tpu.memory_space<vmem>>, %arg5: memref<16x32xf32, #tpu.memory_space<vmem>>) attributes {dimension_semantics = [#tpu.dimension_semantics<arbitrary>], iteration_bounds = array<i64: 2>, scalar_prefetch = 0 : i64, scratch_operands = 1 : i64, tpu.core_type = #tpu.core_type<tc>, window_params = [{pipeline_mode = #tpu.pipeline_mode<synchronous>, transform_indices = @transform_0, window_bounds = array<i64: 2, 8, 32>}, {transform_indices = @transform_1, window_bounds = array<i64: 1, 32, 96>}, {transform_indices = @transform_2, window_bounds = array<i64: 1, 32, 32>}, {pipeline_mode = #tpu.pipeline_mode<synchronous>, transform_indices = @transform_3, window_bounds = array<i64: 2, 8, 32>}]} {
    %c0_i32 = arith.constant 0 : i32
    %0 = arith.cmpi eq, %arg0, %c0_i32 : i32
    %1 = arith.extui %0 : i1 to i32
    %c0_i32_0 = arith.constant 0 : i32
    %2 = arith.cmpi ne, %1, %c0_i32_0 : i32
    scf.if %2 {
      %c0_29 = arith.constant 0 : index
      %c0_30 = arith.constant 0 : index
      %c0_31 = arith.constant 0 : index
      %92 = vector.load %arg1[%c0_29, %c0_30, %c0_31] : memref<2x8x32xf32, #tpu.memory_space<vmem>>, vector<2x8x32xf32>
      %93 = vector.shape_cast %92 : vector<2x8x32xf32> to vector<16x32xf32>
      %c0_32 = arith.constant 0 : index
      %c0_33 = arith.constant 0 : index
      %94 = vector.load %arg5[%c0_32, %c0_33] : memref<16x32xf32, #tpu.memory_space<vmem>>, vector<16x32xf32>
      tpu.vector_store %arg5[%c0_32, %c0_33], %93 {strides = array<i32>} : memref<16x32xf32, #tpu.memory_space<vmem>>, vector<16x32xf32>,
    } else {
    }
    %c0 = arith.constant 0 : index
    %c0_1 = arith.constant 0 : index
    %3 = vector.load %arg5[%c0, %c0_1] : memref<16x32xf32, #tpu.memory_space<vmem>>, vector<16x32xf32>
    %c0_2 = arith.constant 0 : index
    %c0_3 = arith.constant 0 : index
    %c0_4 = arith.constant 0 : index
    %4 = vector.load %arg2[%c0_2, %c0_3, %c0_4] : memref<1x32x96xf32, #tpu.memory_space<vmem>>, vector<1x32x96xf32>
    %5 = vector.shape_cast %4 : vector<1x32x96xf32> to vector<32x96xf32>
    %c0_5 = arith.constant 0 : index
    %c0_6 = arith.constant 0 : index
    %c0_7 = arith.constant 0 : index
    %6 = vector.load %arg3[%c0_5, %c0_6, %c0_7] : memref<1x32x32xf32, #tpu.memory_space<vmem>>, vector<1x32x32xf32>
    %7 = vector.shape_cast %6 : vector<1x32x32xf32> to vector<32x32xf32>
    %cst = arith.constant dense<0.000000e+00> : vector<16x96xf32>
    %8 = tpu.matmul %3, %5, %cst {dimension_numbers = #tpu.dot_dimension_numbers<[1], [0], [0], [1], [0, 0, 1, 1], [], []>} : vector<16x32xf32>, vector<32x96xf32>, vector<16x96xf32> -> vector<16x96xf32>
    %9 = vector.extract_strided_slice %8 {offsets = [0, 0], sizes = [16, 32], strides = [1, 1]} : vector<16x96xf32> to vector<16x32xf32>
    %cst_8 = arith.constant 0.353553385 : f32
    %10 = vector.broadcast %cst_8 : f32 to vector<16x32xf32>
    %11 = arith.mulf %9, %10 : vector<16x32xf32>
    %12 = vector.extract_strided_slice %8 {offsets = [0, 32], sizes = [16, 32], strides = [1, 1]} : vector<16x96xf32> to vector<16x32xf32>
    %13 = vector.extract_strided_slice %8 {offsets = [0, 64], sizes = [16, 32], strides = [1, 1]} : vector<16x96xf32> to vector<16x32xf32>
    %14 = vector.extract_strided_slice %11 {offsets = [0, 0], sizes = [16, 8], strides = [1, 1]} : vector<16x32xf32> to vector<16x8xf32>
    %15 = vector.shape_cast %14 : vector<16x8xf32> to vector<2x8x8xf32>
    %16 = vector.extract_strided_slice %12 {offsets = [0, 0], sizes = [16, 8], strides = [1, 1]} : vector<16x32xf32> to vector<16x8xf32>
    %17 = vector.shape_cast %16 : vector<16x8xf32> to vector<2x8x8xf32>
    %18 = vector.extract_strided_slice %13 {offsets = [0, 0], sizes = [16, 8], strides = [1, 1]} : vector<16x32xf32> to vector<16x8xf32>
    %19 = vector.shape_cast %18 : vector<16x8xf32> to vector<2x8x8xf32>
    "tpu.trace_start"() <{level = 10 : i32, message = "bqd,bkd->bqk"}> : () -> ()
    %cst_9 = arith.constant dense<0.000000e+00> : vector<2x8x8xf32>
    %20 = tpu.matmul %15, %17, %cst_9 {dimension_numbers = #tpu.dot_dimension_numbers<[2], [2], [1], [1], [0, 0, 0, 1, 1, 1], [0], [0]>} : vector<2x8x8xf32>, vector<2x8x8xf32>, vector<2x8x8xf32> -> vector<2x8x8xf32>
    "tpu.trace_stop"() : () -> ()
    %cst_10 = arith.constant dense<0xFF800000> : vector<2x8xf32>
    %21 = vector.multi_reduction <maximumf>, %20, %cst_10 [2] : vector<2x8x8xf32> to vector<2x8xf32>
    %22 = vector.shape_cast %21 : vector<2x8xf32> to vector<2x8x1xf32>
    %23 = vector.broadcast %22 : vector<2x8x1xf32> to vector<2x8x8xf32>
    %24 = arith.subf %20, %23 : vector<2x8x8xf32>
    %25 = math.exp %24 : vector<2x8x8xf32>
    %cst_11 = arith.constant dense<0.000000e+00> : vector<2x8xf32>
    %26 = vector.multi_reduction <add>, %25, %cst_11 [2] : vector<2x8x8xf32> to vector<2x8xf32>
    %27 = vector.shape_cast %26 : vector<2x8xf32> to vector<2x8x1xf32>
    %28 = vector.broadcast %27 : vector<2x8x1xf32> to vector<2x8x8xf32>
    %29 = arith.divf %25, %28 : vector<2x8x8xf32>
    "tpu.trace_start"() <{level = 10 : i32, message = "bqk,bkd->bqd"}> : () -> ()
    %cst_12 = arith.constant dense<0.000000e+00> : vector<2x8x8xf32>
    %30 = tpu.matmul %29, %19, %cst_12 {dimension_numbers = #tpu.dot_dimension_numbers<[2], [1], [1], [2], [0, 0, 0, 1, 1, 2], [0], [0]>} : vector<2x8x8xf32>, vector<2x8x8xf32>, vector<2x8x8xf32> -> vector<2x8x8xf32>
    "tpu.trace_stop"() : () -> ()
    %31 = vector.shape_cast %30 : vector<2x8x8xf32> to vector<16x8xf32>
    %32 = vector.extract_strided_slice %11 {offsets = [0, 8], sizes = [16, 8], strides = [1, 1]} : vector<16x32xf32> to vector<16x8xf32>
    %33 = vector.shape_cast %32 : vector<16x8xf32> to vector<2x8x8xf32>
    %34 = vector.extract_strided_slice %12 {offsets = [0, 8], sizes = [16, 8], strides = [1, 1]} : vector<16x32xf32> to vector<16x8xf32>
    %35 = vector.shape_cast %34 : vector<16x8xf32> to vector<2x8x8xf32>
    %36 = vector.extract_strided_slice %13 {offsets = [0, 8], sizes = [16, 8], strides = [1, 1]} : vector<16x32xf32> to vector<16x8xf32>
    %37 = vector.shape_cast %36 : vector<16x8xf32> to vector<2x8x8xf32>
    "tpu.trace_start"() <{level = 10 : i32, message = "bqd,bkd->bqk"}> : () -> ()
    %cst_13 = arith.constant dense<0.000000e+00> : vector<2x8x8xf32>
    %38 = tpu.matmul %33, %35, %cst_13 {dimension_numbers = #tpu.dot_dimension_numbers<[2], [2], [1], [1], [0, 0, 0, 1, 1, 1], [0], [0]>} : vector<2x8x8xf32>, vector<2x8x8xf32>, vector<2x8x8xf32> -> vector<2x8x8xf32>
    "tpu.trace_stop"() : () -> ()
    %cst_14 = arith.constant dense<0xFF800000> : vector<2x8xf32>
    %39 = vector.multi_reduction <maximumf>, %38, %cst_14 [2] : vector<2x8x8xf32> to vector<2x8xf32>
    %40 = vector.shape_cast %39 : vector<2x8xf32> to vector<2x8x1xf32>
    %41 = vector.broadcast %40 : vector<2x8x1xf32> to vector<2x8x8xf32>
    %42 = arith.subf %38, %41 : vector<2x8x8xf32>
    %43 = math.exp %42 : vector<2x8x8xf32>
    %cst_15 = arith.constant dense<0.000000e+00> : vector<2x8xf32>
    %44 = vector.multi_reduction <add>, %43, %cst_15 [2] : vector<2x8x8xf32> to vector<2x8xf32>
    %45 = vector.shape_cast %44 : vector<2x8xf32> to vector<2x8x1xf32>
    %46 = vector.broadcast %45 : vector<2x8x1xf32> to vector<2x8x8xf32>
    %47 = arith.divf %43, %46 : vector<2x8x8xf32>
    "tpu.trace_start"() <{level = 10 : i32, message = "bqk,bkd->bqd"}> : () -> ()
    %cst_16 = arith.constant dense<0.000000e+00> : vector<2x8x8xf32>
    %48 = tpu.matmul %47, %37, %cst_16 {dimension_numbers = #tpu.dot_dimension_numbers<[2], [1], [1], [2], [0, 0, 0, 1, 1, 2], [0], [0]>} : vector<2x8x8xf32>, vector<2x8x8xf32>, vector<2x8x8xf32> -> vector<2x8x8xf32>
    "tpu.trace_stop"() : () -> ()
    %49 = vector.shape_cast %48 : vector<2x8x8xf32> to vector<16x8xf32>
    %50 = vector.extract_strided_slice %11 {offsets = [0, 16], sizes = [16, 8], strides = [1, 1]} : vector<16x32xf32> to vector<16x8xf32>
    %51 = vector.shape_cast %50 : vector<16x8xf32> to vector<2x8x8xf32>
    %52 = vector.extract_strided_slice %12 {offsets = [0, 16], sizes = [16, 8], strides = [1, 1]} : vector<16x32xf32> to vector<16x8xf32>
    %53 = vector.shape_cast %52 : vector<16x8xf32> to vector<2x8x8xf32>
    %54 = vector.extract_strided_slice %13 {offsets = [0, 16], sizes = [16, 8], strides = [1, 1]} : vector<16x32xf32> to vector<16x8xf32>
    %55 = vector.shape_cast %54 : vector<16x8xf32> to vector<2x8x8xf32>
    "tpu.trace_start"() <{level = 10 : i32, message = "bqd,bkd->bqk"}> : () -> ()
    %cst_17 = arith.constant dense<0.000000e+00> : vector<2x8x8xf32>
    %56 = tpu.matmul %51, %53, %cst_17 {dimension_numbers = #tpu.dot_dimension_numbers<[2], [2], [1], [1], [0, 0, 0, 1, 1, 1], [0], [0]>} : vector<2x8x8xf32>, vector<2x8x8xf32>, vector<2x8x8xf32> -> vector<2x8x8xf32>
    "tpu.trace_stop"() : () -> ()
    %cst_18 = arith.constant dense<0xFF800000> : vector<2x8xf32>
    %57 = vector.multi_reduction <maximumf>, %56, %cst_18 [2] : vector<2x8x8xf32> to vector<2x8xf32>
    %58 = vector.shape_cast %57 : vector<2x8xf32> to vector<2x8x1xf32>
    %59 = vector.broadcast %58 : vector<2x8x1xf32> to vector<2x8x8xf32>
    %60 = arith.subf %56, %59 : vector<2x8x8xf32>
    %61 = math.exp %60 : vector<2x8x8xf32>
    %cst_19 = arith.constant dense<0.000000e+00> : vector<2x8xf32>
    %62 = vector.multi_reduction <add>, %61, %cst_19 [2] : vector<2x8x8xf32> to vector<2x8xf32>
    %63 = vector.shape_cast %62 : vector<2x8xf32> to vector<2x8x1xf32>
    %64 = vector.broadcast %63 : vector<2x8x1xf32> to vector<2x8x8xf32>
    %65 = arith.divf %61, %64 : vector<2x8x8xf32>
    "tpu.trace_start"() <{level = 10 : i32, message = "bqk,bkd->bqd"}> : () -> ()
    %cst_20 = arith.constant dense<0.000000e+00> : vector<2x8x8xf32>
    %66 = tpu.matmul %65, %55, %cst_20 {dimension_numbers = #tpu.dot_dimension_numbers<[2], [1], [1], [2], [0, 0, 0, 1, 1, 2], [0], [0]>} : vector<2x8x8xf32>, vector<2x8x8xf32>, vector<2x8x8xf32> -> vector<2x8x8xf32>
    "tpu.trace_stop"() : () -> ()
    %67 = vector.shape_cast %66 : vector<2x8x8xf32> to vector<16x8xf32>
    %68 = vector.extract_strided_slice %11 {offsets = [0, 24], sizes = [16, 8], strides = [1, 1]} : vector<16x32xf32> to vector<16x8xf32>
    %69 = vector.shape_cast %68 : vector<16x8xf32> to vector<2x8x8xf32>
    %70 = vector.extract_strided_slice %12 {offsets = [0, 24], sizes = [16, 8], strides = [1, 1]} : vector<16x32xf32> to vector<16x8xf32>
    %71 = vector.shape_cast %70 : vector<16x8xf32> to vector<2x8x8xf32>
    %72 = vector.extract_strided_slice %13 {offsets = [0, 24], sizes = [16, 8], strides = [1, 1]} : vector<16x32xf32> to vector<16x8xf32>
    %73 = vector.shape_cast %72 : vector<16x8xf32> to vector<2x8x8xf32>
    "tpu.trace_start"() <{level = 10 : i32, message = "bqd,bkd->bqk"}> : () -> ()
    %cst_21 = arith.constant dense<0.000000e+00> : vector<2x8x8xf32>
    %74 = tpu.matmul %69, %71, %cst_21 {dimension_numbers = #tpu.dot_dimension_numbers<[2], [2], [1], [1], [0, 0, 0, 1, 1, 1], [0], [0]>} : vector<2x8x8xf32>, vector<2x8x8xf32>, vector<2x8x8xf32> -> vector<2x8x8xf32>
    "tpu.trace_stop"() : () -> ()
    %cst_22 = arith.constant dense<0xFF800000> : vector<2x8xf32>
    %75 = vector.multi_reduction <maximumf>, %74, %cst_22 [2] : vector<2x8x8xf32> to vector<2x8xf32>
    %76 = vector.shape_cast %75 : vector<2x8xf32> to vector<2x8x1xf32>
    %77 = vector.broadcast %76 : vector<2x8x1xf32> to vector<2x8x8xf32>
    %78 = arith.subf %74, %77 : vector<2x8x8xf32>
    %79 = math.exp %78 : vector<2x8x8xf32>
    %cst_23 = arith.constant dense<0.000000e+00> : vector<2x8xf32>
    %80 = vector.multi_reduction <add>, %79, %cst_23 [2] : vector<2x8x8xf32> to vector<2x8xf32>
    %81 = vector.shape_cast %80 : vector<2x8xf32> to vector<2x8x1xf32>
    %82 = vector.broadcast %81 : vector<2x8x1xf32> to vector<2x8x8xf32>
    %83 = arith.divf %79, %82 : vector<2x8x8xf32>
    "tpu.trace_start"() <{level = 10 : i32, message = "bqk,bkd->bqd"}> : () -> ()
    %cst_24 = arith.constant dense<0.000000e+00> : vector<2x8x8xf32>
    %84 = tpu.matmul %83, %73, %cst_24 {dimension_numbers = #tpu.dot_dimension_numbers<[2], [1], [1], [2], [0, 0, 0, 1, 1, 2], [0], [0]>} : vector<2x8x8xf32>, vector<2x8x8xf32>, vector<2x8x8xf32> -> vector<2x8x8xf32>
    "tpu.trace_stop"() : () -> ()
    %85 = vector.shape_cast %84 : vector<2x8x8xf32> to vector<16x8xf32>
    %86 = tpu.concatenate %31, %49, %67, %85 in 1 : vector<16x8xf32>, vector<16x8xf32>, vector<16x8xf32>, vector<16x8xf32> -> vector<16x32xf32>
    %cst_25 = arith.constant dense<0.000000e+00> : vector<16x32xf32>
    %87 = tpu.matmul %86, %7, %cst_25 {dimension_numbers = #tpu.dot_dimension_numbers<[1], [0], [0], [1], [0, 0, 1, 1], [], []>} : vector<16x32xf32>, vector<32x32xf32>, vector<16x32xf32> -> vector<16x32xf32>
    %c0_26 = arith.constant 0 : index
    %c0_27 = arith.constant 0 : index
    %88 = vector.load %arg5[%c0_26, %c0_27] : memref<16x32xf32, #tpu.memory_space<vmem>>, vector<16x32xf32>
    tpu.vector_store %arg5[%c0_26, %c0_27], %87 {strides = array<i32>} : memref<16x32xf32, #tpu.memory_space<vmem>>, vector<16x32xf32>,
    %c1_i32 = arith.constant 1 : i32
    %89 = arith.cmpi eq, %arg0, %c1_i32 : i32
    %90 = arith.extui %89 : i1 to i32
    %c0_i32_28 = arith.constant 0 : i32
    %91 = arith.cmpi ne, %90, %c0_i32_28 : i32
    scf.if %91 {
      %92 = vector.shape_cast %87 : vector<16x32xf32> to vector<2x8x32xf32>
      %c0_29 = arith.constant 0 : index
      %c0_30 = arith.constant 0 : index
      %c0_31 = arith.constant 0 : index
      %93 = vector.load %arg4[%c0_29, %c0_30, %c0_31] : memref<2x8x32xf32, #tpu.memory_space<vmem>>, vector<2x8x32xf32>
      tpu.vector_store %arg4[%c0_29, %c0_30, %c0_31], %92 {strides = array<i32>} : memref<2x8x32xf32, #tpu.memory_space<vmem>>, vector<2x8x32xf32>,
    } else {
    }
    return
  }
  func.func @transform_0(%arg0: i32) -> (i32, i32, i32) {
    %c0_i32 = arith.constant 0 : i32
    %c0_i32_0 = arith.constant 0 : i32
    %c0_i32_1 = arith.constant 0 : i32
    %c0_i32_2 = arith.constant 0 : i32
    return %c0_i32, %c0_i32_0, %c0_i32_1 : i32, i32, i32
  }
  func.func @transform_1(%arg0: i32) -> (i32, i32, i32) {
    %c0_i32 = arith.constant 0 : i32
    %c0_i32_0 = arith.constant 0 : i32
    %c0_i32_1 = arith.constant 0 : i32
    return %arg0, %c0_i32, %c0_i32_0 : i32, i32, i32
  }
  func.func @transform_2(%arg0: i32) -> (i32, i32, i32) {
    %c0_i32 = arith.constant 0 : i32
    %c0_i32_0 = arith.constant 0 : i32
    %c0_i32_1 = arith.constant 0 : i32
    return %arg0, %c0_i32, %c0_i32_0 : i32, i32, i32
  }
  func.func @transform_3(%arg0: i32) -> (i32, i32, i32) {
    %c0_i32 = arith.constant 0 : i32
    %c0_i32_0 = arith.constant 0 : i32
    %c0_i32_1 = arith.constant 0 : i32
    %c0_i32_2 = arith.constant 0 : i32
    return %c0_i32, %c0_i32_0, %c0_i32_1 : i32, i32, i32
  }
}

</mosaic_0001>

<llo_original>
// kernel: encoder_forward.1
$region0: #{encoder_forward.1}
  #allocation0 [shape = 'u32[]', space=smem, size = 0x4, offset = 0x4, fixed_abs, tag = 'smem constant byte address 0x4 - core index']
  #allocation1 [shape = 'u32[144,128]{1,0:T(1,128)}', space=vmem, size = 0x12000, scoped, tag = 'internal scratch']
  #allocation2 [shape = 'f32[16,32]{1,0:T(8,128)}', space=vmem, size = 0x2000, scoped, tag = 'scratch operand']
  %s0 = inlined_call_operand.hbm [shape: f32[2,8,32], index: 0, kind: input, shape index: {}]
  %s1 = inlined_call_operand.hbm [shape: f32[2,32,96], index: 1, kind: input, shape index: {}]
  %s2 = inlined_call_operand.hbm [shape: f32[2,32,32], index: 2, kind: input, shape index: {}]
  %s3 = inlined_call_operand.hbm [shape: f32[2,8,32], index: 3, kind: output, shape index: {}]
  %s4 = sld [smem:[#allocation0]]
  $region65: #{encoder_forward.1} parent=0
    _
  %s6 = ssub.s32 1, %s4
  %s7 = scalar_select 0, %s6, %s4
  $region1: #{encoder_forward.1} parent=0
    #allocation3 [shape = 'u8[8192]{0}', space=vmem, size = 0x2000, scoped, tag = 'input window, operand 0, single buffered']
    #allocation4 [shape = 's32[2]{0}', space=sflag, size = 0x8, scoped, tag = 'scoped memory for encoder_forward.1']
    #allocation5 [shape = 's32[2]{0}', space=sflag, size = 0x8, scoped, tag = 'scoped memory for encoder_forward.1']
    #allocation6 [shape = 'u8[32768]{0}', space=vmem, size = 0x8000, scoped, tag = 'input window, operand 1']
    #allocation7 [shape = 's32[2]{0}', space=sflag, size = 0x8, scoped, tag = 'scoped memory for encoder_forward.1']
    #allocation8 [shape = 'u8[32768]{0}', space=vmem, size = 0x8000, scoped, tag = 'input window, operand 2']
    #allocation9 [shape = 'u8[8192]{0}', space=vmem, size = 0x2000, scoped, tag = 'output window, operand 0, single buffered']
    %8 = vsyncpa [#allocation4], 0
    %9 = vsyncpa [#allocation7], 0
    %s10 = scalar_lea.sflag [#allocation7], 1
    %11 = vsyncpa %s10, 0
    %12 = vsyncpa [#allocation5], 0
    loop: start=0, step=1, limit=4
    $region2: #{encoder_forward.1} parent=1 // loop_pre_header
      _
    $region3: #{encoder_forward.1} parent=1 // loop_header
      %s14 = sphi 0, %s18
      %p15 = scmp.ge.s32.totalorder %s14, 4
      %s22 = sphi 0, %s22
      %s24 = sphi 0, %s22
      %s25 = sphi 0, %s24
      %s39 = sphi 0, %s25
      %s45 = sphi 0, %s47
      %s48 = sphi 0, %s45
      %s49 = sphi 0, %s48
      %s65 = sphi 0, %s49
      %s71 = sphi 0, %s73
      %s74 = sphi 0, %s71
      %s75 = sphi 0, %s74
      %s91 = sphi 0, %s75
      %s95 = sphi 0, %s95
      %s97 = sphi 0, %s95
      %s98 = sphi 0, %s97
      %s112 = sphi 0, %s98
    $region4: #{encoder_forward.1} parent=1 // loop_header_branch
      %17 = sbr.rel (%p15) target = $region8
    $region5: #{encoder_forward.1} parent=1 // loop_body
      %s19 = ssub.s32 %s14, 1
      %s20 = ssub.s32 %s14, 2
      %s21 = sadd.s32 %s14, 1
      %s23 = sadd.s32 %s22, 1
      %p26 = scmp.eq.s32.totalorder %s14, 1
      %p27 = scmp.ne.s32.totalorder %s22, %s24
      %p28 = scmp.eq.s32.totalorder %s14, 0
      %p29 = por %p27, %p28
      %p30 = scmp.ne.s32.totalorder %s22, %s24
      %p31 = scmp.eq.s32.totalorder %s19, 1
      %p32 = por %p30, %p31
      %p33 = scmp.ne.s32.totalorder %s24, %s25
      %p34 = scmp.eq.s32.totalorder %s19, 0
      %p35 = por %p33, %p34
      %p36 = scmp.ne.s32.totalorder %s24, %s25
      %p37 = scmp.eq.s32.totalorder %s20, 1
      %p38 = por %p36, %p37
      %p40 = scmp.ne.s32.totalorder %s25, %s39
      %p41 = scmp.eq.s32.totalorder %s20, 0
      %p42 = por %p40, %p41
      %s43 = ssub.s32 %s14, %s21
      %p44 = scmp.eq.s32.totalorder %s43, 0
      %s46 = sadd.s32 %s45, 1
      %s47 = scalar_select %p44, %s45, %s46
      %p50 = pneg %p44
      %p51 = scmp.eq.s32.totalorder %s14, 1
      %p52 = por %p50, %p51
      %p53 = scmp.ne.s32.totalorder %s45, %s48
      %p54 = scmp.eq.s32.totalorder %s14, 0
      %p55 = por %p53, %p54
      %p56 = scmp.ne.s32.totalorder %s45, %s48
      %p57 = scmp.eq.s32.totalorder %s19, 1
      %p58 = por %p56, %p57
      %p59 = scmp.ne.s32.totalorder %s48, %s49
      %p60 = scmp.eq.s32.totalorder %s19, 0
      %p61 = por %p59, %p60
      %p62 = scmp.ne.s32.totalorder %s48, %s49
      %p63 = scmp.eq.s32.totalorder %s20, 1
      %p64 = por %p62, %p63
      %p66 = scmp.ne.s32.totalorder %s49, %s65
      %p67 = scmp.eq.s32.totalorder %s20, 0
      %p68 = por %p66, %p67
      %s69 = ssub.s32 %s14, %s21
      %p70 = scmp.eq.s32.totalorder %s69, 0
      %s72 = sadd.s32 %s71, 1
      %s73 = scalar_select %p70, %s71, %s72
      %p76 = pneg %p70
      %p77 = scmp.eq.s32.totalorder %s14, 1
      %p78 = por %p76, %p77
      %p79 = scmp.ne.s32.totalorder %s71, %s74
      %p80 = scmp.eq.s32.totalorder %s14, 0
      %p81 = por %p79, %p80
      %p82 = scmp.ne.s32.totalorder %s71, %s74
      %p83 = scmp.eq.s32.totalorder %s19, 1
      %p84 = por %p82, %p83
      %p85 = scmp.ne.s32.totalorder %s74, %s75
      %p86 = scmp.eq.s32.totalorder %s19, 0
      %p87 = por %p85, %p86
      %p88 = scmp.ne.s32.totalorder %s74, %s75
      %p89 = scmp.eq.s32.totalorder %s20, 1
      %p90 = por %p88, %p89
      %p92 = scmp.ne.s32.totalorder %s75, %s91
      %p93 = scmp.eq.s32.totalorder %s20, 0
      %p94 = por %p92, %p93
      %s96 = sadd.s32 %s95, 1
      %p99 = scmp.eq.s32.totalorder %s14, 1
      %p100 = scmp.ne.s32.totalorder %s95, %s97
      %p101 = scmp.eq.s32.totalorder %s14, 0
      %p102 = por %p100, %p101
      %p103 = scmp.ne.s32.totalorder %s95, %s97
      %p104 = scmp.eq.s32.totalorder %s19, 1
      %p105 = por %p103, %p104
      %p106 = scmp.ne.s32.totalorder %s97, %s98
      %p107 = scmp.eq.s32.totalorder %s19, 0
      %p108 = por %p106, %p107
      %p109 = scmp.ne.s32.totalorder %s97, %s98
      %p110 = scmp.eq.s32.totalorder %s20, 1
      %p111 = por %p109, %p110
      %p113 = scmp.ne.s32.totalorder %s98, %s112
      %p114 = scmp.eq.s32.totalorder %s20, 0
      %p115 = por %p113, %p114
      %p116 = scmp.le.s32.totalorder 1, %s14
      %p117 = scmp.lt.s32.totalorder %s14, 3
      %p118 = pnand %p116, %p117
      %p119 = pneg %p118
      // Predicated region
      $region9: #{encoder_forward.1} parent=5 // pred_check
        _
      $region10: #{encoder_forward.1} parent=5 // pred_check_branch
        %121 = sbr.rel (%p118) target = $region12
      $region11: #{encoder_forward.1} parent=5 // pred_region
        %s122 = ssub.s32 %s14, 1
        // Predicated region
        $region13: #{encoder_forward.1} parent=11 // pred_check
          %p123 = pneg %p35
        $region14: #{encoder_forward.1} parent=11 // pred_check_branch
          %125 = sbr.rel (%p123) target = $region16
        $region15: #{encoder_forward.1} parent=11 // pred_region
          %s127 = ssub.s32 256, 256
          %128 = vsyncadd [#allocation4], %s127
          %s129 = sshll.u32 [#allocation3], 4
          %s130 = int_to_ptr.vmem [resolvable:$true] %s129
          %135 = dma.hbm_to_vmem [thread:$0]  %s0, 256, %s130, [#allocation4], 128, 128, 8
        $region16: #{encoder_forward.1} parent=11 // pred_fallthru
          _
      $region12: #{encoder_forward.1} parent=5 // pred_fallthru
        _
      %p136 = scmp.lt.s32.totalorder %s14, 2
      // Predicated region
      $region17: #{encoder_forward.1} parent=5 // pred_check
        %p137 = pneg %p136
      $region18: #{encoder_forward.1} parent=5 // pred_check_branch
        %139 = sbr.rel (%p137) target = $region20
      $region19: #{encoder_forward.1} parent=5 // pred_region
        // Predicated region
        $region21: #{encoder_forward.1} parent=19 // pred_check
          %p140 = pneg %p55
        $region22: #{encoder_forward.1} parent=19 // pred_check_branch
          %142 = sbr.rel (%p140) target = $region24
        $region23: #{encoder_forward.1} parent=19 // pred_region
          %s143 = sand.u32 %s14, 1
          %s144 = scalar_lea.sflag [#allocation7], %s143
          %s145 = sand.u32 %s45, 1
          %s146 = smul.addr %s145, 32
          %s147 = scalar_lea.vmem [#allocation6], %s146
          %s149 = ssub.s32 512, 512
          %150 = vsyncadd %s144, %s149
          %s151 = smul.addr %s14, 4
          %s152 = smul.addr %s151, 128
          %s153 = scalar_lea.hbm %s1, %s152
          %s154 = sshll.u32 %s147, 4
          %s155 = int_to_ptr.vmem [resolvable:$true] %s154
          %160 = dma.hbm_to_vmem [thread:$0]  %s153, 512, %s155, %s144, 128, 128, 8
        $region24: #{encoder_forward.1} parent=19 // pred_fallthru
          _
        // Predicated region
        $region25: #{encoder_forward.1} parent=19 // pred_check
          %p161 = pneg %p81
        $region26: #{encoder_forward.1} parent=19 // pred_check_branch
          %163 = sbr.rel (%p161) target = $region28
        $region27: #{encoder_forward.1} parent=19 // pred_region
          %s164 = sand.u32 %s14, 1
          %s165 = scalar_lea.sflag [#allocation7], %s164
          %s166 = sand.u32 %s71, 1
          %s167 = smul.addr %s166, 32
          %s168 = scalar_lea.vmem [#allocation8], %s167
          %s170 = ssub.s32 512, 512
          %171 = vsyncadd %s165, %s170
          %s172 = smul.addr %s14, 4
          %s173 = smul.addr %s172, 128
          %s174 = scalar_lea.hbm %s2, %s173
          %s175 = sshll.u32 %s168, 4
          %s176 = int_to_ptr.vmem [resolvable:$true] %s175
          %181 = dma.hbm_to_vmem [thread:$0]  %s174, 512, %s176, %s165, 128, 128, 8
        $region28: #{encoder_forward.1} parent=19 // pred_fallthru
          _
      $region20: #{encoder_forward.1} parent=5 // pred_fallthru
        _
      %p182 = scmp.le.s32.totalorder 1, %s14
      %p183 = scmp.lt.s32.totalorder %s14, 3
      %p184 = pnand %p182, %p183
      %p185 = pneg %p184
      // Predicated region
      $region29: #{encoder_forward.1} parent=5 // pred_check
        _
      $region30: #{encoder_forward.1} parent=5 // pred_check_branch
        %187 = sbr.rel (%p184) target = $region32
      $region31: #{encoder_forward.1} parent=5 // pred_region
        %s188 = ssub.s32 %s14, 1
        // Predicated region
        $region33: #{encoder_forward.1} parent=31 // pred_check
          %p189 = pneg %p35
        $region34: #{encoder_forward.1} parent=31 // pred_check_branch
          %191 = sbr.rel (%p189) target = $region36
        $region35: #{encoder_forward.1} parent=31 // pred_region
          %192 = dma.done [#allocation4], 256
        $region36: #{encoder_forward.1} parent=31 // pred_fallthru
          _
        %s193 = sand.u32 %s19, 1
        %s194 = scalar_lea.sflag [#allocation7], %s193
        %s195 = sand.u32 %s48, 1
        %s196 = smul.addr %s195, 32
        %s197 = scalar_lea.vmem [#allocation6], %s196
        // Predicated region
        $region37: #{encoder_forward.1} parent=31 // pred_check
          %p198 = pneg %p61
        $region38: #{encoder_forward.1} parent=31 // pred_check_branch
          %200 = sbr.rel (%p198) target = $region40
        $region39: #{encoder_forward.1} parent=31 // pred_region
          %201 = dma.done %s194, 512
        $region40: #{encoder_forward.1} parent=31 // pred_fallthru
          _
        %s202 = sand.u32 %s19, 1
        %s203 = scalar_lea.sflag [#allocation7], %s202
        %s204 = sand.u32 %s74, 1
        %s205 = smul.addr %s204, 32
        %s206 = scalar_lea.vmem [#allocation8], %s205
        // Predicated region
        $region41: #{encoder_forward.1} parent=31 // pred_check
          %p207 = pneg %p87
        $region42: #{encoder_forward.1} parent=31 // pred_check_branch
          %209 = sbr.rel (%p207) target = $region44
        $region43: #{encoder_forward.1} parent=31 // pred_region
          %210 = dma.done %s203, 512
        $region44: #{encoder_forward.1} parent=31 // pred_fallthru
          _
        %p211 = pneg %p35
        %p212 = pneg %p32
        %s213 = sand.u32 %s19, 1
        %s214 = scalar_lea.sflag [#allocation7], %s213
        %s215 = sand.u32 %s48, 1
        %s216 = smul.addr %s215, 32
        %s217 = scalar_lea.vmem [#allocation6], %s216
        %p218 = pneg %p61
        %p219 = pneg %p58
        %s220 = sand.u32 %s19, 1
        %s221 = scalar_lea.sflag [#allocation7], %s220
        %s222 = sand.u32 %s74, 1
        %s223 = smul.addr %s222, 32
        %s224 = scalar_lea.vmem [#allocation8], %s223
        %p225 = pneg %p87
        %p226 = pneg %p84
        %p227 = pneg %p108
        %p228 = pneg %p105
        %p229 = scmp.eq.s32.totalorder %s19, 0
        // Predicated region
        $region45: #{encoder_forward.1} parent=31 // pred_check
          %p230 = pneg %p229
        $region46: #{encoder_forward.1} parent=31 // pred_check_branch
          %232 = sbr.rel (%p230) target = $region48
        $region47: #{encoder_forward.1} parent=31 // pred_region
          %v233 = vld [vmem:[#allocation3] sm:$0xff]
          %v234 = vld [vmem:[#allocation3 + $0x8] sm:$0xff]
          %vm235 = vcmask 261120
          %236 = vst.msk [vmem:[#allocation2] sm:$0xff] %vm235, %v233
          %237 = vst.msk [vmem:[#allocation2 + $0x8] sm:$0xff] %vm235, %v234
        $region48: #{encoder_forward.1} parent=31 // pred_fallthru
          _
        %v238 = vld [vmem:[#allocation2] sm:$0xff]
        %v239 = vld [vmem:[#allocation2 + $0x8] sm:$0xff]
        %v240 = vld [vmem:[%s197] sm:$0xff]
        %v241 = vld [vmem:[%s197 + $0x8] sm:$0xff]
        %v242 = vld [vmem:[%s197 + $0x10] sm:$0xff]
        %v243 = vld [vmem:[%s197 + $0x18] sm:$0xff]
        %v244 = vld [vmem:[%s206] sm:$0xff]
        %v245 = vld [vmem:[%s206 + $0x8] sm:$0xff]
        %v246 = vld [vmem:[%s206 + $0x10] sm:$0xff]
        %v247 = vld [vmem:[%s206 + $0x18] sm:$0xff]
        %vm248 = vcmask 261120
        %v250 = vsel %vm248, %v238, 0
        %v253 = vsel %vm248, %v239, 0
        %255 = vmatprep.subr.mxu0 0.0
        %256 = vmatpush1.msra.mxu0 %v240
        %257 = vmatprep.subr.mxu0 0.0
        %258 = vmatpush1.msra.mxu0 %v241
        %259 = vmatprep.subr.mxu0 0.0
        %260 = vmatpush1.msra.mxu0 %v242
        %261 = vmatprep.subr.mxu0 0.0
        %262 = vmatpush1.msra.mxu0 %v243
        %263 = vmatprep.subr.mxu0 0.0
        %264 = vmatpush1.msra.mxu0 0.0
        %265 = vmatprep.subr.mxu0 0.0
        %266 = vmatpush1.msra.mxu0 0.0
        %267 = vmatprep.subr.mxu0 0.0
        %268 = vmatpush1.msra.mxu0 0.0
        %269 = vmatprep.subr.mxu0 0.0
        %270 = vmatpush1.msra.mxu0 0.0
        %271 = vmatprep.subr.mxu0 0.0
        %272 = vmatpush1.msra.mxu0 0.0
        %273 = vmatprep.subr.mxu0 0.0
        %274 = vmatpush1.msra.mxu0 0.0
        %275 = vmatprep.subr.mxu0 0.0
        %276 = vmatpush1.msra.mxu0 0.0
        %277 = vmatprep.subr.mxu0 0.0
        %278 = vmatpush1.msra.mxu0 0.0
        %279 = vmatprep.subr.mxu0 0.0
        %280 = vmatpush1.msra.mxu0 0.0
        %281 = vmatprep.subr.mxu0 0.0
        %282 = vmatpush1.msra.mxu0 0.0
        %283 = vmatprep.subr.mxu0 0.0
        %284 = vmatpush1.msra.mxu0 0.0
        %285 = vmatprep.subr.mxu0 0.0
        %286 = vmatpush1.msra.mxu0 0.0
        %287 = vmatprep.subr.mxu0 0.0
        %288 = vmatpush1.msra.mxu0 0.0
        %289 = vmatprep.subr.mxu0 0.0
        %290 = vmatpush1.msra.mxu0 0.0
        %291 = vmatprep.subr.mxu0 0.0
        %292 = vmatpush1.msra.mxu0 0.0
        %293 = vmatprep.subr.mxu0 0.0
        %294 = vmatpush1.msra.mxu0 0.0
        %295 = vmatprep.subr.mxu0 0.0
        %296 = vmatpush1.msra.mxu0 0.0
        %297 = vmatprep.subr.mxu0 0.0
        %298 = vmatpush1.msra.mxu0 0.0
        %299 = vmatprep.subr.mxu0 0.0
        %300 = vmatpush1.msra.mxu0 0.0
        %301 = vmatprep.subr.mxu0 0.0
        %302 = vmatpush1.msra.mxu0 0.0
        %303 = vmatprep.subr.mxu0 0.0
        %304 = vmatpush1.msra.mxu0 0.0
        %305 = vmatprep.subr.mxu0 0.0
        %306 = vmatpush1.msra.mxu0 0.0
        %307 = vmatprep.subr.mxu0 0.0
        %308 = vmatpush1.msra.mxu0 0.0
        %309 = vmatprep.subr.mxu0 0.0
        %310 = vmatpush1.msra.mxu0 0.0
        %311 = vmatprep.subr.mxu0 0.0
        %312 = vmatpush1.msra.mxu0 0.0
        %313 = vmatprep.subr.mxu0 0.0
        %314 = vmatpush1.msra.mxu0 0.0
        %315 = vmatprep.subr.mxu0 0.0
        %316 = vmatpush1.msra.mxu0 0.0
        %317 = vmatprep.subr.mxu0 0.0
        %318 = vmatpush1.msra.mxu0 0.0
        %319 = vmatprep.mubr.f32.mxu0 0.0
        %320 = vmatmul.mubr.f32.gmra.mrb[0].mxu0 %v250
        %v321 = vpop.f32.mrb[0].mxu0
        %v322 = vadd.f32 0.0, %v321
        %v323 = vpop.f32.mrb[0].mxu0
        %324 = vmatprep.mubr.f32.mxu0 0.0
        %325 = vmatmul.mubr.f32.gmra.mrb[0].mxu0 %v253
        %v326 = vpop.f32.mrb[0].mxu0
        %v327 = vadd.f32 0.0, %v326
        %v328 = vpop.f32.mrb[0].mxu0
        %329 = vdwg.mxu0
        %v330 = vmul.f32 %v322, 0.35355338
        %v331 = vmul.f32 %v327, 0.35355338
        %333 = vrot.lane.b32.xlu0 %v322, 96
        %v334 = vpop.permute.xlu0 %333
        %vm335 = vcmask 64512
        %v337 = vsel %vm335, %v330, 0
        %v339 = vsel %vm335, %v334, 0
        %341 = vmatprep.subr.mxu0 0.0
        %342 = vmatpush1.xpose.msra.mxu0 %v339
        %343 = vmatprep.subr.mxu0 0.0
        %344 = vmatpush1.xpose.msra.mxu0 0.0
        %345 = vmatprep.subr.mxu0 0.0
        %346 = vmatpush1.xpose.msra.mxu0 0.0
        %347 = vmatprep.subr.mxu0 0.0
        %348 = vmatpush1.xpose.msra.mxu0 0.0
        %349 = vmatprep.subr.mxu0 0.0
        %350 = vmatpush1.xpose.msra.mxu0 0.0
        %351 = vmatprep.subr.mxu0 0.0
        %352 = vmatpush1.xpose.msra.mxu0 0.0
        %353 = vmatprep.subr.mxu0 0.0
        %354 = vmatpush1.xpose.msra.mxu0 0.0
        %355 = vmatprep.subr.mxu0 0.0
        %356 = vmatpush1.xpose.msra.mxu0 0.0
        %357 = vmatprep.subr.mxu0 0.0
        %358 = vmatpush1.xpose.msra.mxu0 0.0
        %359 = vmatprep.subr.mxu0 0.0
        %360 = vmatpush1.xpose.msra.mxu0 0.0
        %361 = vmatprep.subr.mxu0 0.0
        %362 = vmatpush1.xpose.msra.mxu0 0.0
        %363 = vmatprep.subr.mxu0 0.0
        %364 = vmatpush1.xpose.msra.mxu0 0.0
        %365 = vmatprep.subr.mxu0 0.0
        %366 = vmatpush1.xpose.msra.mxu0 0.0
        %367 = vmatprep.subr.mxu0 0.0
        %368 = vmatpush1.xpose.msra.mxu0 0.0
        %369 = vmatprep.subr.mxu0 0.0
        %370 = vmatpush1.xpose.msra.mxu0 0.0
        %371 = vmatprep.subr.mxu0 0.0
        %372 = vmatpush1.xpose.msra.mxu0 0.0
        %373 = vmatprep.subr.mxu0 0.0
        %374 = vmatpush1.xpose.msra.mxu0 0.0
        %375 = vmatprep.subr.mxu0 0.0
        %376 = vmatpush1.xpose.msra.mxu0 0.0
        %377 = vmatprep.subr.mxu0 0.0
        %378 = vmatpush1.xpose.msra.mxu0 0.0
        %379 = vmatprep.subr.mxu0 0.0
        %380 = vmatpush1.xpose.msra.mxu0 0.0
        %381 = vmatprep.subr.mxu0 0.0
        %382 = vmatpush1.xpose.msra.mxu0 0.0
        %383 = vmatprep.subr.mxu0 0.0
        %384 = vmatpush1.xpose.msra.mxu0 0.0
        %385 = vmatprep.subr.mxu0 0.0
        %386 = vmatpush1.xpose.msra.mxu0 0.0
        %387 = vmatprep.subr.mxu0 0.0
        %388 = vmatpush1.xpose.msra.mxu0 0.0
        %389 = vmatprep.subr.mxu0 0.0
        %390 = vmatpush1.xpose.msra.mxu0 0.0
        %391 = vmatprep.subr.mxu0 0.0
        %392 = vmatpush1.xpose.msra.mxu0 0.0
        %393 = vmatprep.subr.mxu0 0.0
        %394 = vmatpush1.xpose.msra.mxu0 0.0
        %395 = vmatprep.subr.mxu0 0.0
        %396 = vmatpush1.xpose.msra.mxu0 0.0
        %397 = vmatprep.subr.mxu0 0.0
        %398 = vmatpush1.xpose.msra.mxu0 0.0
        %399 = vmatprep.subr.mxu0 0.0
        %400 = vmatpush1.xpose.msra.mxu0 0.0
        %401 = vmatprep.subr.mxu0 0.0
        %402 = vmatpush1.xpose.msra.mxu0 0.0
        %403 = vmatprep.subr.mxu0 0.0
        %404 = vmatpush1.xpose.msra.mxu0 0.0
        %405 = vmatprep.mubr.f32.mxu0 0.0
        %406 = vmatmul.mubr.f32.gmra.mrb[0].mxu0 %v337
        %v407 = vpop.f32.mrb[0].mxu0
        %v408 = vadd.f32 0.0, %v407
        %v409 = vpop.f32.mrb[0].mxu0
        %410 = vdwg.mxu0
        %412 = vrot.lane.b32.xlu0 %v327, 96
        %v413 = vpop.permute.xlu0 %412
        %v415 = vsel %vm335, %v331, 0
        %v417 = vsel %vm335, %v413, 0
        %419 = vmatprep.subr.mxu0 0.0
        %420 = vmatpush1.xpose.msra.mxu0 %v417
        %421 = vmatprep.subr.mxu0 0.0
        %422 = vmatpush1.xpose.msra.mxu0 0.0
        %423 = vmatprep.subr.mxu0 0.0
        %424 = vmatpush1.xpose.msra.mxu0 0.0
        %425 = vmatprep.subr.mxu0 0.0
        %426 = vmatpush1.xpose.msra.mxu0 0.0
        %427 = vmatprep.subr.mxu0 0.0
        %428 = vmatpush1.xpose.msra.mxu0 0.0
        %429 = vmatprep.subr.mxu0 0.0
        %430 = vmatpush1.xpose.msra.mxu0 0.0
        %431 = vmatprep.subr.mxu0 0.0
        %432 = vmatpush1.xpose.msra.mxu0 0.0
        %433 = vmatprep.subr.mxu0 0.0
        %434 = vmatpush1.xpose.msra.mxu0 0.0
        %435 = vmatprep.subr.mxu0 0.0
        %436 = vmatpush1.xpose.msra.mxu0 0.0
        %437 = vmatprep.subr.mxu0 0.0
        %438 = vmatpush1.xpose.msra.mxu0 0.0
        %439 = vmatprep.subr.mxu0 0.0
        %440 = vmatpush1.xpose.msra.mxu0 0.0
        %441 = vmatprep.subr.mxu0 0.0
        %442 = vmatpush1.xpose.msra.mxu0 0.0
        %443 = vmatprep.subr.mxu0 0.0
        %444 = vmatpush1.xpose.msra.mxu0 0.0
        %445 = vmatprep.subr.mxu0 0.0
        %446 = vmatpush1.xpose.msra.mxu0 0.0
        %447 = vmatprep.subr.mxu0 0.0
        %448 = vmatpush1.xpose.msra.mxu0 0.0
        %449 = vmatprep.subr.mxu0 0.0
        %450 = vmatpush1.xpose.msra.mxu0 0.0
        %451 = vmatprep.subr.mxu0 0.0
        %452 = vmatpush1.xpose.msra.mxu0 0.0
        %453 = vmatprep.subr.mxu0 0.0
        %454 = vmatpush1.xpose.msra.mxu0 0.0
        %455 = vmatprep.subr.mxu0 0.0
        %456 = vmatpush1.xpose.msra.mxu0 0.0
        %457 = vmatprep.subr.mxu0 0.0
        %458 = vmatpush1.xpose.msra.mxu0 0.0
        %459 = vmatprep.subr.mxu0 0.0
        %460 = vmatpush1.xpose.msra.mxu0 0.0
        %461 = vmatprep.subr.mxu0 0.0
        %462 = vmatpush1.xpose.msra.mxu0 0.0
        %463 = vmatprep.subr.mxu0 0.0
        %464 = vmatpush1.xpose.msra.mxu0 0.0
        %465 = vmatprep.subr.mxu0 0.0
        %466 = vmatpush1.xpose.msra.mxu0 0.0
        %467 = vmatprep.subr.mxu0 0.0
        %468 = vmatpush1.xpose.msra.mxu0 0.0
        %469 = vmatprep.subr.mxu0 0.0
        %470 = vmatpush1.xpose.msra.mxu0 0.0
        %471 = vmatprep.subr.mxu0 0.0
        %472 = vmatpush1.xpose.msra.mxu0 0.0
        %473 = vmatprep.subr.mxu0 0.0
        %474 = vmatpush1.xpose.msra.mxu0 0.0
        %475 = vmatprep.subr.mxu0 0.0
        %476 = vmatpush1.xpose.msra.mxu0 0.0
        %477 = vmatprep.subr.mxu0 0.0
        %478 = vmatpush1.xpose.msra.mxu0 0.0
        %479 = vmatprep.subr.mxu0 0.0
        %480 = vmatpush1.xpose.msra.mxu0 0.0
        %481 = vmatprep.subr.mxu0 0.0
        %482 = vmatpush1.xpose.msra.mxu0 0.0
        %483 = vmatprep.mubr.f32.mxu0 0.0
        %484 = vmatmul.mubr.f32.gmra.mrb[0].mxu0 %v415
        %v485 = vpop.f32.mrb[0].mxu0
        %v486 = vadd.f32 0.0, %v485
        %v487 = vpop.f32.mrb[0].mxu0
        %488 = vdwg.mxu0
        %v489 = vsel %vm335, %v408, -inf
        %490 = vmax.xlane.f32.xlu0 %v489
        %v491 = vpop.xlane.xlu0 %490
        %v492 = vsel %vm335, %v486, -inf
        %493 = vmax.xlane.f32.xlu0 %v492
        %v494 = vpop.xlane.xlu0 %493
        %v495 = vsub.f32 %v408, %v491
        %v496 = vsub.f32 %v486, %v494
        %v497 = vmul.f32 %v495, 1.442695
        %v498 = vpow.pop %v497
        %v499 = vmul.f32 %v496, 1.442695
        %v500 = vpow.pop %v499
        %v501 = vsel %vm335, %v498, 0.0
        %502 = vadd.xlane.f32.xlu0 %v501
        %v503 = vpop.xlane.xlu0 %502
        %v504 = vsel %vm335, %v500, 0.0
        %505 = vadd.xlane.f32.xlu0 %v504
        %v506 = vpop.xlane.xlu0 %505
        %v507 = vrcp.pop %v503
        %v508 = vmul.f32 %v498, %v507
        %v509 = vrcp.pop %v506
        %v510 = vmul.f32 %v500, %v509
        %511 = vrot.lane.b32.xlu0 %v322, 64
        %v512 = vpop.permute.xlu0 %511
        %v515 = vsel %vm335, %v508, 0
        %517 = vmatprep.subr.mxu0 0.0
        %518 = vmatpush1.msra.mxu0 %v512
        %519 = vmatprep.subr.mxu0 0.0
        %520 = vmatpush1.msra.mxu0 0.0
        %521 = vmatprep.subr.mxu0 0.0
        %522 = vmatpush1.msra.mxu0 0.0
        %523 = vmatprep.subr.mxu0 0.0
        %524 = vmatpush1.msra.mxu0 0.0
        %525 = vmatprep.subr.mxu0 0.0
        %526 = vmatpush1.msra.mxu0 0.0
        %527 = vmatprep.subr.mxu0 0.0
        %528 = vmatpush1.msra.mxu0 0.0
        %529 = vmatprep.subr.mxu0 0.0
        %530 = vmatpush1.msra.mxu0 0.0
        %531 = vmatprep.subr.mxu0 0.0
        %532 = vmatpush1.msra.mxu0 0.0
        %533 = vmatprep.subr.mxu0 0.0
        %534 = vmatpush1.msra.mxu0 0.0
        %535 = vmatprep.subr.mxu0 0.0
        %536 = vmatpush1.msra.mxu0 0.0
        %537 = vmatprep.subr.mxu0 0.0
        %538 = vmatpush1.msra.mxu0 0.0
        %539 = vmatprep.subr.mxu0 0.0
        %540 = vmatpush1.msra.mxu0 0.0
        %541 = vmatprep.subr.mxu0 0.0
        %542 = vmatpush1.msra.mxu0 0.0
        %543 = vmatprep.subr.mxu0 0.0
        %544 = vmatpush1.msra.mxu0 0.0
        %545 = vmatprep.subr.mxu0 0.0
        %546 = vmatpush1.msra.mxu0 0.0
        %547 = vmatprep.subr.mxu0 0.0
        %548 = vmatpush1.msra.mxu0 0.0
        %549 = vmatprep.subr.mxu0 0.0
        %550 = vmatpush1.msra.mxu0 0.0
        %551 = vmatprep.subr.mxu0 0.0
        %552 = vmatpush1.msra.mxu0 0.0
        %553 = vmatprep.subr.mxu0 0.0
        %554 = vmatpush1.msra.mxu0 0.0
        %555 = vmatprep.subr.mxu0 0.0
        %556 = vmatpush1.msra.mxu0 0.0
        %557 = vmatprep.subr.mxu0 0.0
        %558 = vmatpush1.msra.mxu0 0.0
        %559 = vmatprep.subr.mxu0 0.0
        %560 = vmatpush1.msra.mxu0 0.0
        %561 = vmatprep.subr.mxu0 0.0
        %562 = vmatpush1.msra.mxu0 0.0
        %563 = vmatprep.subr.mxu0 0.0
        %564 = vmatpush1.msra.mxu0 0.0
        %565 = vmatprep.subr.mxu0 0.0
        %566 = vmatpush1.msra.mxu0 0.0
        %567 = vmatprep.subr.mxu0 0.0
        %568 = vmatpush1.msra.mxu0 0.0
        %569 = vmatprep.subr.mxu0 0.0
        %570 = vmatpush1.msra.mxu0 0.0
        %571 = vmatprep.subr.mxu0 0.0
        %572 = vmatpush1.msra.mxu0 0.0
        %573 = vmatprep.subr.mxu0 0.0
        %574 = vmatpush1.msra.mxu0 0.0
        %575 = vmatprep.subr.mxu0 0.0
        %576 = vmatpush1.msra.mxu0 0.0
        %577 = vmatprep.subr.mxu0 0.0
        %578 = vmatpush1.msra.mxu0 0.0
        %579 = vmatprep.subr.mxu0 0.0
        %580 = vmatpush1.msra.mxu0 0.0
        %581 = vmatprep.mubr.f32.mxu0 0.0
        %582 = vmatmul.mubr.f32.gmra.mrb[0].mxu0 %v515
        %v583 = vpop.f32.mrb[0].mxu0
        %v584 = vadd.f32 0.0, %v583
        %v585 = vpop.f32.mrb[0].mxu0
        %586 = vdwg.mxu0
        %587 = vrot.lane.b32.xlu0 %v327, 64
        %v588 = vpop.permute.xlu0 %587
        %v591 = vsel %vm335, %v510, 0
        %593 = vmatprep.subr.mxu0 0.0
        %594 = vmatpush1.msra.mxu0 %v588
        %595 = vmatprep.subr.mxu0 0.0
        %596 = vmatpush1.msra.mxu0 0.0
        %597 = vmatprep.subr.mxu0 0.0
        %598 = vmatpush1.msra.mxu0 0.0
        %599 = vmatprep.subr.mxu0 0.0
        %600 = vmatpush1.msra.mxu0 0.0
        %601 = vmatprep.subr.mxu0 0.0
        %602 = vmatpush1.msra.mxu0 0.0
        %603 = vmatprep.subr.mxu0 0.0
        %604 = vmatpush1.msra.mxu0 0.0
        %605 = vmatprep.subr.mxu0 0.0
        %606 = vmatpush1.msra.mxu0 0.0
        %607 = vmatprep.subr.mxu0 0.0
        %608 = vmatpush1.msra.mxu0 0.0
        %609 = vmatprep.subr.mxu0 0.0
        %610 = vmatpush1.msra.mxu0 0.0
        %611 = vmatprep.subr.mxu0 0.0
        %612 = vmatpush1.msra.mxu0 0.0
        %613 = vmatprep.subr.mxu0 0.0
        %614 = vmatpush1.msra.mxu0 0.0
        %615 = vmatprep.subr.mxu0 0.0
        %616 = vmatpush1.msra.mxu0 0.0
        %617 = vmatprep.subr.mxu0 0.0
        %618 = vmatpush1.msra.mxu0 0.0
        %619 = vmatprep.subr.mxu0 0.0
        %620 = vmatpush1.msra.mxu0 0.0
        %621 = vmatprep.subr.mxu0 0.0
        %622 = vmatpush1.msra.mxu0 0.0
        %623 = vmatprep.subr.mxu0 0.0
        %624 = vmatpush1.msra.mxu0 0.0
        %625 = vmatprep.subr.mxu0 0.0
        %626 = vmatpush1.msra.mxu0 0.0
        %627 = vmatprep.subr.mxu0 0.0
        %628 = vmatpush1.msra.mxu0 0.0
        %629 = vmatprep.subr.mxu0 0.0
        %630 = vmatpush1.msra.mxu0 0.0
        %631 = vmatprep.subr.mxu0 0.0
        %632 = vmatpush1.msra.mxu0 0.0
        %633 = vmatprep.subr.mxu0 0.0
        %634 = vmatpush1.msra.mxu0 0.0
        %635 = vmatprep.subr.mxu0 0.0
        %636 = vmatpush1.msra.mxu0 0.0
        %637 = vmatprep.subr.mxu0 0.0
        %638 = vmatpush1.msra.mxu0 0.0
        %639 = vmatprep.subr.mxu0 0.0
        %640 = vmatpush1.msra.mxu0 0.0
        %641 = vmatprep.subr.mxu0 0.0
        %642 = vmatpush1.msra.mxu0 0.0
        %643 = vmatprep.subr.mxu0 0.0
        %644 = vmatpush1.msra.mxu0 0.0
        %645 = vmatprep.subr.mxu0 0.0
        %646 = vmatpush1.msra.mxu0 0.0
        %647 = vmatprep.subr.mxu0 0.0
        %648 = vmatpush1.msra.mxu0 0.0
        %649 = vmatprep.subr.mxu0 0.0
        %650 = vmatpush1.msra.mxu0 0.0
        %651 = vmatprep.subr.mxu0 0.0
        %652 = vmatpush1.msra.mxu0 0.0
        %653 = vmatprep.subr.mxu0 0.0
        %654 = vmatpush1.msra.mxu0 0.0
        %655 = vmatprep.subr.mxu0 0.0
        %656 = vmatpush1.msra.mxu0 0.0
        %657 = vmatprep.mubr.f32.mxu0 0.0
        %658 = vmatmul.mubr.f32.gmra.mrb[0].mxu0 %v591
        %v659 = vpop.f32.mrb[0].mxu0
        %v660 = vadd.f32 0.0, %v659
        %v661 = vpop.f32.mrb[0].mxu0
        %662 = vdwg.mxu0
        %663 = vrot.lane.b32.xlu0 %v330, 120
        %v664 = vpop.permute.xlu0 %663
        %665 = vrot.lane.b32.xlu0 %v322, 88
        %v666 = vpop.permute.xlu0 %665
        %v667 = vsel %vm335, %v664, 0
        %v669 = vsel %vm335, %v666, 0
        %671 = vmatprep.subr.mxu0 0.0
        %672 = vmatpush1.xpose.msra.mxu0 %v669
        %673 = vmatprep.subr.mxu0 0.0
        %674 = vmatpush1.xpose.msra.mxu0 0.0
        %675 = vmatprep.subr.mxu0 0.0
        %676 = vmatpush1.xpose.msra.mxu0 0.0
        %677 = vmatprep.subr.mxu0 0.0
        %678 = vmatpush1.xpose.msra.mxu0 0.0
        %679 = vmatprep.subr.mxu0 0.0
        %680 = vmatpush1.xpose.msra.mxu0 0.0
        %681 = vmatprep.subr.mxu0 0.0
        %682 = vmatpush1.xpose.msra.mxu0 0.0
        %683 = vmatprep.subr.mxu0 0.0
        %684 = vmatpush1.xpose.msra.mxu0 0.0
        %685 = vmatprep.subr.mxu0 0.0
        %686 = vmatpush1.xpose.msra.mxu0 0.0
        %687 = vmatprep.subr.mxu0 0.0
        %688 = vmatpush1.xpose.msra.mxu0 0.0
        %689 = vmatprep.subr.mxu0 0.0
        %690 = vmatpush1.xpose.msra.mxu0 0.0
        %691 = vmatprep.subr.mxu0 0.0
        %692 = vmatpush1.xpose.msra.mxu0 0.0
        %693 = vmatprep.subr.mxu0 0.0
        %694 = vmatpush1.xpose.msra.mxu0 0.0
        %695 = vmatprep.subr.mxu0 0.0
        %696 = vmatpush1.xpose.msra.mxu0 0.0
        %697 = vmatprep.subr.mxu0 0.0
        %698 = vmatpush1.xpose.msra.mxu0 0.0
        %699 = vmatprep.subr.mxu0 0.0
        %700 = vmatpush1.xpose.msra.mxu0 0.0
        %701 = vmatprep.subr.mxu0 0.0
        %702 = vmatpush1.xpose.msra.mxu0 0.0
        %703 = vmatprep.subr.mxu0 0.0
        %704 = vmatpush1.xpose.msra.mxu0 0.0
        %705 = vmatprep.subr.mxu0 0.0
        %706 = vmatpush1.xpose.msra.mxu0 0.0
        %707 = vmatprep.subr.mxu0 0.0
        %708 = vmatpush1.xpose.msra.mxu0 0.0
        %709 = vmatprep.subr.mxu0 0.0
        %710 = vmatpush1.xpose.msra.mxu0 0.0
        %711 = vmatprep.subr.mxu0 0.0
        %712 = vmatpush1.xpose.msra.mxu0 0.0
        %713 = vmatprep.subr.mxu0 0.0
        %714 = vmatpush1.xpose.msra.mxu0 0.0
        %715 = vmatprep.subr.mxu0 0.0
        %716 = vmatpush1.xpose.msra.mxu0 0.0
        %717 = vmatprep.subr.mxu0 0.0
        %718 = vmatpush1.xpose.msra.mxu0 0.0
        %719 = vmatprep.subr.mxu0 0.0
        %720 = vmatpush1.xpose.msra.mxu0 0.0
        %721 = vmatprep.subr.mxu0 0.0
        %722 = vmatpush1.xpose.msra.mxu0 0.0
        %723 = vmatprep.subr.mxu0 0.0
        %724 = vmatpush1.xpose.msra.mxu0 0.0
        %725 = vmatprep.subr.mxu0 0.0
        %726 = vmatpush1.xpose.msra.mxu0 0.0
        %727 = vmatprep.subr.mxu0 0.0
        %728 = vmatpush1.xpose.msra.mxu0 0.0
        %729 = vmatprep.subr.mxu0 0.0
        %730 = vmatpush1.xpose.msra.mxu0 0.0
        %731 = vmatprep.subr.mxu0 0.0
        %732 = vmatpush1.xpose.msra.mxu0 0.0
        %733 = vmatprep.subr.mxu0 0.0
        %734 = vmatpush1.xpose.msra.mxu0 0.0
        %735 = vmatprep.mubr.f32.mxu0 0.0
        %736 = vmatmul.mubr.f32.gmra.mrb[0].mxu0 %v667
        %v737 = vpop.f32.mrb[0].mxu0
        %v738 = vadd.f32 0.0, %v737
        %v739 = vpop.f32.mrb[0].mxu0
        %740 = vdwg.mxu0
        %741 = vrot.lane.b32.xlu0 %v331, 120
        %v742 = vpop.permute.xlu0 %741
        %743 = vrot.lane.b32.xlu0 %v327, 88
        %v744 = vpop.permute.xlu0 %743
        %v745 = vsel %vm335, %v742, 0
        %v747 = vsel %vm335, %v744, 0
        %749 = vmatprep.subr.mxu0 0.0
        %750 = vmatpush1.xpose.msra.mxu0 %v747
        %751 = vmatprep.subr.mxu0 0.0
        %752 = vmatpush1.xpose.msra.mxu0 0.0
        %753 = vmatprep.subr.mxu0 0.0
        %754 = vmatpush1.xpose.msra.mxu0 0.0
        %755 = vmatprep.subr.mxu0 0.0
        %756 = vmatpush1.xpose.msra.mxu0 0.0
        %757 = vmatprep.subr.mxu0 0.0
        %758 = vmatpush1.xpose.msra.mxu0 0.0
        %759 = vmatprep.subr.mxu0 0.0
        %760 = vmatpush1.xpose.msra.mxu0 0.0
        %761 = vmatprep.subr.mxu0 0.0
        %762 = vmatpush1.xpose.msra.mxu0 0.0
        %763 = vmatprep.subr.mxu0 0.0
        %764 = vmatpush1.xpose.msra.mxu0 0.0
        %765 = vmatprep.subr.mxu0 0.0
        %766 = vmatpush1.xpose.msra.mxu0 0.0
        %767 = vmatprep.subr.mxu0 0.0
        %768 = vmatpush1.xpose.msra.mxu0 0.0
        %769 = vmatprep.subr.mxu0 0.0
        %770 = vmatpush1.xpose.msra.mxu0 0.0
        %771 = vmatprep.subr.mxu0 0.0
        %772 = vmatpush1.xpose.msra.mxu0 0.0
        %773 = vmatprep.subr.mxu0 0.0
        %774 = vmatpush1.xpose.msra.mxu0 0.0
        %775 = vmatprep.subr.mxu0 0.0
        %776 = vmatpush1.xpose.msra.mxu0 0.0
        %777 = vmatprep.subr.mxu0 0.0
        %778 = vmatpush1.xpose.msra.mxu0 0.0
        %779 = vmatprep.subr.mxu0 0.0
        %780 = vmatpush1.xpose.msra.mxu0 0.0
        %781 = vmatprep.subr.mxu0 0.0
        %782 = vmatpush1.xpose.msra.mxu0 0.0
        %783 = vmatprep.subr.mxu0 0.0
        %784 = vmatpush1.xpose.msra.mxu0 0.0
        %785 = vmatprep.subr.mxu0 0.0
        %786 = vmatpush1.xpose.msra.mxu0 0.0
        %787 = vmatprep.subr.mxu0 0.0
        %788 = vmatpush1.xpose.msra.mxu0 0.0
        %789 = vmatprep.subr.mxu0 0.0
        %790 = vmatpush1.xpose.msra.mxu0 0.0
        %791 = vmatprep.subr.mxu0 0.0
        %792 = vmatpush1.xpose.msra.mxu0 0.0
        %793 = vmatprep.subr.mxu0 0.0
        %794 = vmatpush1.xpose.msra.mxu0 0.0
        %795 = vmatprep.subr.mxu0 0.0
        %796 = vmatpush1.xpose.msra.mxu0 0.0
        %797 = vmatprep.subr.mxu0 0.0
        %798 = vmatpush1.xpose.msra.mxu0 0.0
        %799 = vmatprep.subr.mxu0 0.0
        %800 = vmatpush1.xpose.msra.mxu0 0.0
        %801 = vmatprep.subr.mxu0 0.0
        %802 = vmatpush1.xpose.msra.mxu0 0.0
        %803 = vmatprep.subr.mxu0 0.0
        %804 = vmatpush1.xpose.msra.mxu0 0.0
        %805 = vmatprep.subr.mxu0 0.0
        %806 = vmatpush1.xpose.msra.mxu0 0.0
        %807 = vmatprep.subr.mxu0 0.0
        %808 = vmatpush1.xpose.msra.mxu0 0.0
        %809 = vmatprep.subr.mxu0 0.0
        %810 = vmatpush1.xpose.msra.mxu0 0.0
        %811 = vmatprep.subr.mxu0 0.0
        %812 = vmatpush1.xpose.msra.mxu0 0.0
        %813 = vmatprep.mubr.f32.mxu0 0.0
        %814 = vmatmul.mubr.f32.gmra.mrb[0].mxu0 %v745
        %v815 = vpop.f32.mrb[0].mxu0
        %v816 = vadd.f32 0.0, %v815
        %v817 = vpop.f32.mrb[0].mxu0
        %818 = vdwg.mxu0
        %v819 = vsel %vm335, %v738, -inf
        %820 = vmax.xlane.f32.xlu0 %v819
        %v821 = vpop.xlane.xlu0 %820
        %v822 = vsel %vm335, %v816, -inf
        %823 = vmax.xlane.f32.xlu0 %v822
        %v824 = vpop.xlane.xlu0 %823
        %v825 = vsub.f32 %v738, %v821
        %v826 = vsub.f32 %v816, %v824
        %v827 = vmul.f32 %v825, 1.442695
        %v828 = vpow.pop %v827
        %v829 = vmul.f32 %v826, 1.442695
        %v830 = vpow.pop %v829
        %v831 = vsel %vm335, %v828, 0.0
        %832 = vadd.xlane.f32.xlu0 %v831
        %v833 = vpop.xlane.xlu0 %832
        %v834 = vsel %vm335, %v830, 0.0
        %835 = vadd.xlane.f32.xlu0 %v834
        %v836 = vpop.xlane.xlu0 %835
        %v837 = vrcp.pop %v833
        %v838 = vmul.f32 %v828, %v837
        %v839 = vrcp.pop %v836
        %v840 = vmul.f32 %v830, %v839
        %841 = vrot.lane.b32.xlu0 %v322, 56
        %v842 = vpop.permute.xlu0 %841
        %v845 = vsel %vm335, %v838, 0
        %847 = vmatprep.subr.mxu0 0.0
        %848 = vmatpush1.msra.mxu0 %v842
        %849 = vmatprep.subr.mxu0 0.0
        %850 = vmatpush1.msra.mxu0 0.0
        %851 = vmatprep.subr.mxu0 0.0
        %852 = vmatpush1.msra.mxu0 0.0
        %853 = vmatprep.subr.mxu0 0.0
        %854 = vmatpush1.msra.mxu0 0.0
        %855 = vmatprep.subr.mxu0 0.0
        %856 = vmatpush1.msra.mxu0 0.0
        %857 = vmatprep.subr.mxu0 0.0
        %858 = vmatpush1.msra.mxu0 0.0
        %859 = vmatprep.subr.mxu0 0.0
        %860 = vmatpush1.msra.mxu0 0.0
        %861 = vmatprep.subr.mxu0 0.0
        %862 = vmatpush1.msra.mxu0 0.0
        %863 = vmatprep.subr.mxu0 0.0
        %864 = vmatpush1.msra.mxu0 0.0
        %865 = vmatprep.subr.mxu0 0.0
        %866 = vmatpush1.msra.mxu0 0.0
        %867 = vmatprep.subr.mxu0 0.0
        %868 = vmatpush1.msra.mxu0 0.0
        %869 = vmatprep.subr.mxu0 0.0
        %870 = vmatpush1.msra.mxu0 0.0
        %871 = vmatprep.subr.mxu0 0.0
        %872 = vmatpush1.msra.mxu0 0.0
        %873 = vmatprep.subr.mxu0 0.0
        %874 = vmatpush1.msra.mxu0 0.0
        %875 = vmatprep.subr.mxu0 0.0
        %876 = vmatpush1.msra.mxu0 0.0
        %877 = vmatprep.subr.mxu0 0.0
        %878 = vmatpush1.msra.mxu0 0.0
        %879 = vmatprep.subr.mxu0 0.0
        %880 = vmatpush1.msra.mxu0 0.0
        %881 = vmatprep.subr.mxu0 0.0
        %882 = vmatpush1.msra.mxu0 0.0
        %883 = vmatprep.subr.mxu0 0.0
        %884 = vmatpush1.msra.mxu0 0.0
        %885 = vmatprep.subr.mxu0 0.0
        %886 = vmatpush1.msra.mxu0 0.0
        %887 = vmatprep.subr.mxu0 0.0
        %888 = vmatpush1.msra.mxu0 0.0
        %889 = vmatprep.subr.mxu0 0.0
        %890 = vmatpush1.msra.mxu0 0.0
        %891 = vmatprep.subr.mxu0 0.0
        %892 = vmatpush1.msra.mxu0 0.0
        %893 = vmatprep.subr.mxu0 0.0
        %894 = vmatpush1.msra.mxu0 0.0
        %895 = vmatprep.subr.mxu0 0.0
        %896 = vmatpush1.msra.mxu0 0.0
        %897 = vmatprep.subr.mxu0 0.0
        %898 = vmatpush1.msra.mxu0 0.0
        %899 = vmatprep.subr.mxu0 0.0
        %900 = vmatpush1.msra.mxu0 0.0
        %901 = vmatprep.subr.mxu0 0.0
        %902 = vmatpush1.msra.mxu0 0.0
        %903 = vmatprep.subr.mxu0 0.0
        %904 = vmatpush1.msra.mxu0 0.0
        %905 = vmatprep.subr.mxu0 0.0
        %906 = vmatpush1.msra.mxu0 0.0
        %907 = vmatprep.subr.mxu0 0.0
        %908 = vmatpush1.msra.mxu0 0.0
        %909 = vmatprep.subr.mxu0 0.0
        %910 = vmatpush1.msra.mxu0 0.0
        %911 = vmatprep.mubr.f32.mxu0 0.0
        %912 = vmatmul.mubr.f32.gmra.mrb[0].mxu0 %v845
        %v913 = vpop.f32.mrb[0].mxu0
        %v914 = vadd.f32 0.0, %v913
        %v915 = vpop.f32.mrb[0].mxu0
        %916 = vdwg.mxu0
        %917 = vrot.lane.b32.xlu0 %v327, 56
        %v918 = vpop.permute.xlu0 %917
        %v921 = vsel %vm335, %v840, 0
        %923 = vmatprep.subr.mxu0 0.0
        %924 = vmatpush1.msra.mxu0 %v918
        %925 = vmatprep.subr.mxu0 0.0
        %926 = vmatpush1.msra.mxu0 0.0
        %927 = vmatprep.subr.mxu0 0.0
        %928 = vmatpush1.msra.mxu0 0.0
        %929 = vmatprep.subr.mxu0 0.0
        %930 = vmatpush1.msra.mxu0 0.0
        %931 = vmatprep.subr.mxu0 0.0
        %932 = vmatpush1.msra.mxu0 0.0
        %933 = vmatprep.subr.mxu0 0.0
        %934 = vmatpush1.msra.mxu0 0.0
        %935 = vmatprep.subr.mxu0 0.0
        %936 = vmatpush1.msra.mxu0 0.0
        %937 = vmatprep.subr.mxu0 0.0
        %938 = vmatpush1.msra.mxu0 0.0
        %939 = vmatprep.subr.mxu0 0.0
        %940 = vmatpush1.msra.mxu0 0.0
        %941 = vmatprep.subr.mxu0 0.0
        %942 = vmatpush1.msra.mxu0 0.0
        %943 = vmatprep.subr.mxu0 0.0
        %944 = vmatpush1.msra.mxu0 0.0
        %945 = vmatprep.subr.mxu0 0.0
        %946 = vmatpush1.msra.mxu0 0.0
        %947 = vmatprep.subr.mxu0 0.0
        %948 = vmatpush1.msra.mxu0 0.0
        %949 = vmatprep.subr.mxu0 0.0
        %950 = vmatpush1.msra.mxu0 0.0
        %951 = vmatprep.subr.mxu0 0.0
        %952 = vmatpush1.msra.mxu0 0.0
        %953 = vmatprep.subr.mxu0 0.0
        %954 = vmatpush1.msra.mxu0 0.0
        %955 = vmatprep.subr.mxu0 0.0
        %956 = vmatpush1.msra.mxu0 0.0
        %957 = vmatprep.subr.mxu0 0.0
        %958 = vmatpush1.msra.mxu0 0.0
        %959 = vmatprep.subr.mxu0 0.0
        %960 = vmatpush1.msra.mxu0 0.0
        %961 = vmatprep.subr.mxu0 0.0
        %962 = vmatpush1.msra.mxu0 0.0
        %963 = vmatprep.subr.mxu0 0.0
        %964 = vmatpush1.msra.mxu0 0.0
        %965 = vmatprep.subr.mxu0 0.0
        %966 = vmatpush1.msra.mxu0 0.0
        %967 = vmatprep.subr.mxu0 0.0
        %968 = vmatpush1.msra.mxu0 0.0
        %969 = vmatprep.subr.mxu0 0.0
        %970 = vmatpush1.msra.mxu0 0.0
        %971 = vmatprep.subr.mxu0 0.0
        %972 = vmatpush1.msra.mxu0 0.0
        %973 = vmatprep.subr.mxu0 0.0
        %974 = vmatpush1.msra.mxu0 0.0
        %975 = vmatprep.subr.mxu0 0.0
        %976 = vmatpush1.msra.mxu0 0.0
        %977 = vmatprep.subr.mxu0 0.0
        %978 = vmatpush1.msra.mxu0 0.0
        %979 = vmatprep.subr.mxu0 0.0
        %980 = vmatpush1.msra.mxu0 0.0
        %981 = vmatprep.subr.mxu0 0.0
        %982 = vmatpush1.msra.mxu0 0.0
        %983 = vmatprep.subr.mxu0 0.0
        %984 = vmatpush1.msra.mxu0 0.0
        %985 = vmatprep.subr.mxu0 0.0
        %986 = vmatpush1.msra.mxu0 0.0
        %987 = vmatprep.mubr.f32.mxu0 0.0
        %988 = vmatmul.mubr.f32.gmra.mrb[0].mxu0 %v921
        %v989 = vpop.f32.mrb[0].mxu0
        %v990 = vadd.f32 0.0, %v989
        %v991 = vpop.f32.mrb[0].mxu0
        %992 = vdwg.mxu0
        %993 = vrot.lane.b32.xlu0 %v330, 112
        %v994 = vpop.permute.xlu0 %993
        %995 = vrot.lane.b32.xlu0 %v322, 80
        %v996 = vpop.permute.xlu0 %995
        %v997 = vsel %vm335, %v994, 0
        %v999 = vsel %vm335, %v996, 0
        %1001 = vmatprep.subr.mxu0 0.0
        %1002 = vmatpush1.xpose.msra.mxu0 %v999
        %1003 = vmatprep.subr.mxu0 0.0
        %1004 = vmatpush1.xpose.msra.mxu0 0.0
        %1005 = vmatprep.subr.mxu0 0.0
        %1006 = vmatpush1.xpose.msra.mxu0 0.0
        %1007 = vmatprep.subr.mxu0 0.0
        %1008 = vmatpush1.xpose.msra.mxu0 0.0
        %1009 = vmatprep.subr.mxu0 0.0
        %1010 = vmatpush1.xpose.msra.mxu0 0.0
        %1011 = vmatprep.subr.mxu0 0.0
        %1012 = vmatpush1.xpose.msra.mxu0 0.0
        %1013 = vmatprep.subr.mxu0 0.0
        %1014 = vmatpush1.xpose.msra.mxu0 0.0
        %1015 = vmatprep.subr.mxu0 0.0
        %1016 = vmatpush1.xpose.msra.mxu0 0.0
        %1017 = vmatprep.subr.mxu0 0.0
        %1018 = vmatpush1.xpose.msra.mxu0 0.0
        %1019 = vmatprep.subr.mxu0 0.0
        %1020 = vmatpush1.xpose.msra.mxu0 0.0
        %1021 = vmatprep.subr.mxu0 0.0
        %1022 = vmatpush1.xpose.msra.mxu0 0.0
        %1023 = vmatprep.subr.mxu0 0.0
        %1024 = vmatpush1.xpose.msra.mxu0 0.0
        %1025 = vmatprep.subr.mxu0 0.0
        %1026 = vmatpush1.xpose.msra.mxu0 0.0
        %1027 = vmatprep.subr.mxu0 0.0
        %1028 = vmatpush1.xpose.msra.mxu0 0.0
        %1029 = vmatprep.subr.mxu0 0.0
        %1030 = vmatpush1.xpose.msra.mxu0 0.0
        %1031 = vmatprep.subr.mxu0 0.0
        %1032 = vmatpush1.xpose.msra.mxu0 0.0
        %1033 = vmatprep.subr.mxu0 0.0
        %1034 = vmatpush1.xpose.msra.mxu0 0.0
        %1035 = vmatprep.subr.mxu0 0.0
        %1036 = vmatpush1.xpose.msra.mxu0 0.0
        %1037 = vmatprep.subr.mxu0 0.0
        %1038 = vmatpush1.xpose.msra.mxu0 0.0
        %1039 = vmatprep.subr.mxu0 0.0
        %1040 = vmatpush1.xpose.msra.mxu0 0.0
        %1041 = vmatprep.subr.mxu0 0.0
        %1042 = vmatpush1.xpose.msra.mxu0 0.0
        %1043 = vmatprep.subr.mxu0 0.0
        %1044 = vmatpush1.xpose.msra.mxu0 0.0
        %1045 = vmatprep.subr.mxu0 0.0
        %1046 = vmatpush1.xpose.msra.mxu0 0.0
        %1047 = vmatprep.subr.mxu0 0.0
        %1048 = vmatpush1.xpose.msra.mxu0 0.0
        %1049 = vmatprep.subr.mxu0 0.0
        %1050 = vmatpush1.xpose.msra.mxu0 0.0
        %1051 = vmatprep.subr.mxu0 0.0
        %1052 = vmatpush1.xpose.msra.mxu0 0.0
        %1053 = vmatprep.subr.mxu0 0.0
        %1054 = vmatpush1.xpose.msra.mxu0 0.0
        %1055 = vmatprep.subr.mxu0 0.0
        %1056 = vmatpush1.xpose.msra.mxu0 0.0
        %1057 = vmatprep.subr.mxu0 0.0
        %1058 = vmatpush1.xpose.msra.mxu0 0.0
        %1059 = vmatprep.subr.mxu0 0.0
        %1060 = vmatpush1.xpose.msra.mxu0 0.0
        %1061 = vmatprep.subr.mxu0 0.0
        %1062 = vmatpush1.xpose.msra.mxu0 0.0
        %1063 = vmatprep.subr.mxu0 0.0
        %1064 = vmatpush1.xpose.msra.mxu0 0.0
        %1065 = vmatprep.mubr.f32.mxu0 0.0
        %1066 = vmatmul.mubr.f32.gmra.mrb[0].mxu0 %v997
        %v1067 = vpop.f32.mrb[0].mxu0
        %v1068 = vadd.f32 0.0, %v1067
        %v1069 = vpop.f32.mrb[0].mxu0
        %1070 = vdwg.mxu0
        %1071 = vrot.lane.b32.xlu0 %v331, 112
        %v1072 = vpop.permute.xlu0 %1071
        %1073 = vrot.lane.b32.xlu0 %v327, 80
        %v1074 = vpop.permute.xlu0 %1073
        %v1075 = vsel %vm335, %v1072, 0
        %v1077 = vsel %vm335, %v1074, 0
        %1079 = vmatprep.subr.mxu0 0.0
        %1080 = vmatpush1.xpose.msra.mxu0 %v1077
        %1081 = vmatprep.subr.mxu0 0.0
        %1082 = vmatpush1.xpose.msra.mxu0 0.0
        %1083 = vmatprep.subr.mxu0 0.0
        %1084 = vmatpush1.xpose.msra.mxu0 0.0
        %1085 = vmatprep.subr.mxu0 0.0
        %1086 = vmatpush1.xpose.msra.mxu0 0.0
        %1087 = vmatprep.subr.mxu0 0.0
        %1088 = vmatpush1.xpose.msra.mxu0 0.0
        %1089 = vmatprep.subr.mxu0 0.0
        %1090 = vmatpush1.xpose.msra.mxu0 0.0
        %1091 = vmatprep.subr.mxu0 0.0
        %1092 = vmatpush1.xpose.msra.mxu0 0.0
        %1093 = vmatprep.subr.mxu0 0.0
        %1094 = vmatpush1.xpose.msra.mxu0 0.0
        %1095 = vmatprep.subr.mxu0 0.0
        %1096 = vmatpush1.xpose.msra.mxu0 0.0
        %1097 = vmatprep.subr.mxu0 0.0
        %1098 = vmatpush1.xpose.msra.mxu0 0.0
        %1099 = vmatprep.subr.mxu0 0.0
        %1100 = vmatpush1.xpose.msra.mxu0 0.0
        %1101 = vmatprep.subr.mxu0 0.0
        %1102 = vmatpush1.xpose.msra.mxu0 0.0
        %1103 = vmatprep.subr.mxu0 0.0
        %1104 = vmatpush1.xpose.msra.mxu0 0.0
        %1105 = vmatprep.subr.mxu0 0.0
        %1106 = vmatpush1.xpose.msra.mxu0 0.0
        %1107 = vmatprep.subr.mxu0 0.0
        %1108 = vmatpush1.xpose.msra.mxu0 0.0
        %1109 = vmatprep.subr.mxu0 0.0
        %1110 = vmatpush1.xpose.msra.mxu0 0.0
        %1111 = vmatprep.subr.mxu0 0.0
        %1112 = vmatpush1.xpose.msra.mxu0 0.0
        %1113 = vmatprep.subr.mxu0 0.0
        %1114 = vmatpush1.xpose.msra.mxu0 0.0
        %1115 = vmatprep.subr.mxu0 0.0
        %1116 = vmatpush1.xpose.msra.mxu0 0.0
        %1117 = vmatprep.subr.mxu0 0.0
        %1118 = vmatpush1.xpose.msra.mxu0 0.0
        %1119 = vmatprep.subr.mxu0 0.0
        %1120 = vmatpush1.xpose.msra.mxu0 0.0
        %1121 = vmatprep.subr.mxu0 0.0
        %1122 = vmatpush1.xpose.msra.mxu0 0.0
        %1123 = vmatprep.subr.mxu0 0.0
        %1124 = vmatpush1.xpose.msra.mxu0 0.0
        %1125 = vmatprep.subr.mxu0 0.0
        %1126 = vmatpush1.xpose.msra.mxu0 0.0
        %1127 = vmatprep.subr.mxu0 0.0
        %1128 = vmatpush1.xpose.msra.mxu0 0.0
        %1129 = vmatprep.subr.mxu0 0.0
        %1130 = vmatpush1.xpose.msra.mxu0 0.0
        %1131 = vmatprep.subr.mxu0 0.0
        %1132 = vmatpush1.xpose.msra.mxu0 0.0
        %1133 = vmatprep.subr.mxu0 0.0
        %1134 = vmatpush1.xpose.msra.mxu0 0.0
        %1135 = vmatprep.subr.mxu0 0.0
        %1136 = vmatpush1.xpose.msra.mxu0 0.0
        %1137 = vmatprep.subr.mxu0 0.0
        %1138 = vmatpush1.xpose.msra.mxu0 0.0
        %1139 = vmatprep.subr.mxu0 0.0
        %1140 = vmatpush1.xpose.msra.mxu0 0.0
        %1141 = vmatprep.subr.mxu0 0.0
        %1142 = vmatpush1.xpose.msra.mxu0 0.0
        %1143 = vmatprep.mubr.f32.mxu0 0.0
        %1144 = vmatmul.mubr.f32.gmra.mrb[0].mxu0 %v1075
        %v1145 = vpop.f32.mrb[0].mxu0
        %v1146 = vadd.f32 0.0, %v1145
        %v1147 = vpop.f32.mrb[0].mxu0
        %1148 = vdwg.mxu0
        %v1149 = vsel %vm335, %v1068, -inf
        %1150 = vmax.xlane.f32.xlu0 %v1149
        %v1151 = vpop.xlane.xlu0 %1150
        %v1152 = vsel %vm335, %v1146, -inf
        %1153 = vmax.xlane.f32.xlu0 %v1152
        %v1154 = vpop.xlane.xlu0 %1153
        %v1155 = vsub.f32 %v1068, %v1151
        %v1156 = vsub.f32 %v1146, %v1154
        %v1157 = vmul.f32 %v1155, 1.442695
        %v1158 = vpow.pop %v1157
        %v1159 = vmul.f32 %v1156, 1.442695
        %v1160 = vpow.pop %v1159
        %v1161 = vsel %vm335, %v1158, 0.0
        %1162 = vadd.xlane.f32.xlu0 %v1161
        %v1163 = vpop.xlane.xlu0 %1162
        %v1164 = vsel %vm335, %v1160, 0.0
        %1165 = vadd.xlane.f32.xlu0 %v1164
        %v1166 = vpop.xlane.xlu0 %1165
        %v1167 = vrcp.pop %v1163
        %v1168 = vmul.f32 %v1158, %v1167
        %v1169 = vrcp.pop %v1166
        %v1170 = vmul.f32 %v1160, %v1169
        %1171 = vrot.lane.b32.xlu0 %v322, 48
        %v1172 = vpop.permute.xlu0 %1171
        %v1175 = vsel %vm335, %v1168, 0
        %1177 = vmatprep.subr.mxu0 0.0
        %1178 = vmatpush1.msra.mxu0 %v1172
        %1179 = vmatprep.subr.mxu0 0.0
        %1180 = vmatpush1.msra.mxu0 0.0
        %1181 = vmatprep.subr.mxu0 0.0
        %1182 = vmatpush1.msra.mxu0 0.0
        %1183 = vmatprep.subr.mxu0 0.0
        %1184 = vmatpush1.msra.mxu0 0.0
        %1185 = vmatprep.subr.mxu0 0.0
        %1186 = vmatpush1.msra.mxu0 0.0
        %1187 = vmatprep.subr.mxu0 0.0
        %1188 = vmatpush1.msra.mxu0 0.0
        %1189 = vmatprep.subr.mxu0 0.0
        %1190 = vmatpush1.msra.mxu0 0.0
        %1191 = vmatprep.subr.mxu0 0.0
        %1192 = vmatpush1.msra.mxu0 0.0
        %1193 = vmatprep.subr.mxu0 0.0
        %1194 = vmatpush1.msra.mxu0 0.0
        %1195 = vmatprep.subr.mxu0 0.0
        %1196 = vmatpush1.msra.mxu0 0.0
        %1197 = vmatprep.subr.mxu0 0.0
        %1198 = vmatpush1.msra.mxu0 0.0
        %1199 = vmatprep.subr.mxu0 0.0
        %1200 = vmatpush1.msra.mxu0 0.0
        %1201 = vmatprep.subr.mxu0 0.0
        %1202 = vmatpush1.msra.mxu0 0.0
        %1203 = vmatprep.subr.mxu0 0.0
        %1204 = vmatpush1.msra.mxu0 0.0
        %1205 = vmatprep.subr.mxu0 0.0
        %1206 = vmatpush1.msra.mxu0 0.0
        %1207 = vmatprep.subr.mxu0 0.0
        %1208 = vmatpush1.msra.mxu0 0.0
        %1209 = vmatprep.subr.mxu0 0.0
        %1210 = vmatpush1.msra.mxu0 0.0
        %1211 = vmatprep.subr.mxu0 0.0
        %1212 = vmatpush1.msra.mxu0 0.0
        %1213 = vmatprep.subr.mxu0 0.0
        %1214 = vmatpush1.msra.mxu0 0.0
        %1215 = vmatprep.subr.mxu0 0.0
        %1216 = vmatpush1.msra.mxu0 0.0
        %1217 = vmatprep.subr.mxu0 0.0
        %1218 = vmatpush1.msra.mxu0 0.0
        %1219 = vmatprep.subr.mxu0 0.0
        %1220 = vmatpush1.msra.mxu0 0.0
        %1221 = vmatprep.subr.mxu0 0.0
        %1222 = vmatpush1.msra.mxu0 0.0
        %1223 = vmatprep.subr.mxu0 0.0
        %1224 = vmatpush1.msra.mxu0 0.0
        %1225 = vmatprep.subr.mxu0 0.0
        %1226 = vmatpush1.msra.mxu0 0.0
        %1227 = vmatprep.subr.mxu0 0.0
        %1228 = vmatpush1.msra.mxu0 0.0
        %1229 = vmatprep.subr.mxu0 0.0
        %1230 = vmatpush1.msra.mxu0 0.0
        %1231 = vmatprep.subr.mxu0 0.0
        %1232 = vmatpush1.msra.mxu0 0.0
        %1233 = vmatprep.subr.mxu0 0.0
        %1234 = vmatpush1.msra.mxu0 0.0
        %1235 = vmatprep.subr.mxu0 0.0
        %1236 = vmatpush1.msra.mxu0 0.0
        %1237 = vmatprep.subr.mxu0 0.0
        %1238 = vmatpush1.msra.mxu0 0.0
        %1239 = vmatprep.subr.mxu0 0.0
        %1240 = vmatpush1.msra.mxu0 0.0
        %1241 = vmatprep.mubr.f32.mxu0 0.0
        %1242 = vmatmul.mubr.f32.gmra.mrb[0].mxu0 %v1175
        %v1243 = vpop.f32.mrb[0].mxu0
        %v1244 = vadd.f32 0.0, %v1243
        %v1245 = vpop.f32.mrb[0].mxu0
        %1246 = vdwg.mxu0
        %1247 = vrot.lane.b32.xlu0 %v327, 48
        %v1248 = vpop.permute.xlu0 %1247
        %v1251 = vsel %vm335, %v1170, 0
        %1253 = vmatprep.subr.mxu0 0.0
        %1254 = vmatpush1.msra.mxu0 %v1248
        %1255 = vmatprep.subr.mxu0 0.0
        %1256 = vmatpush1.msra.mxu0 0.0
        %1257 = vmatprep.subr.mxu0 0.0
        %1258 = vmatpush1.msra.mxu0 0.0
        %1259 = vmatprep.subr.mxu0 0.0
        %1260 = vmatpush1.msra.mxu0 0.0
        %1261 = vmatprep.subr.mxu0 0.0
        %1262 = vmatpush1.msra.mxu0 0.0
        %1263 = vmatprep.subr.mxu0 0.0
        %1264 = vmatpush1.msra.mxu0 0.0
        %1265 = vmatprep.subr.mxu0 0.0
        %1266 = vmatpush1.msra.mxu0 0.0
        %1267 = vmatprep.subr.mxu0 0.0
        %1268 = vmatpush1.msra.mxu0 0.0
        %1269 = vmatprep.subr.mxu0 0.0
        %1270 = vmatpush1.msra.mxu0 0.0
        %1271 = vmatprep.subr.mxu0 0.0
        %1272 = vmatpush1.msra.mxu0 0.0
        %1273 = vmatprep.subr.mxu0 0.0
        %1274 = vmatpush1.msra.mxu0 0.0
        %1275 = vmatprep.subr.mxu0 0.0
        %1276 = vmatpush1.msra.mxu0 0.0
        %1277 = vmatprep.subr.mxu0 0.0
        %1278 = vmatpush1.msra.mxu0 0.0
        %1279 = vmatprep.subr.mxu0 0.0
        %1280 = vmatpush1.msra.mxu0 0.0
        %1281 = vmatprep.subr.mxu0 0.0
        %1282 = vmatpush1.msra.mxu0 0.0
        %1283 = vmatprep.subr.mxu0 0.0
        %1284 = vmatpush1.msra.mxu0 0.0
        %1285 = vmatprep.subr.mxu0 0.0
        %1286 = vmatpush1.msra.mxu0 0.0
        %1287 = vmatprep.subr.mxu0 0.0
        %1288 = vmatpush1.msra.mxu0 0.0
        %1289 = vmatprep.subr.mxu0 0.0
        %1290 = vmatpush1.msra.mxu0 0.0
        %1291 = vmatprep.subr.mxu0 0.0
        %1292 = vmatpush1.msra.mxu0 0.0
        %1293 = vmatprep.subr.mxu0 0.0
        %1294 = vmatpush1.msra.mxu0 0.0
        %1295 = vmatprep.subr.mxu0 0.0
        %1296 = vmatpush1.msra.mxu0 0.0
        %1297 = vmatprep.subr.mxu0 0.0
        %1298 = vmatpush1.msra.mxu0 0.0
        %1299 = vmatprep.subr.mxu0 0.0
        %1300 = vmatpush1.msra.mxu0 0.0
        %1301 = vmatprep.subr.mxu0 0.0
        %1302 = vmatpush1.msra.mxu0 0.0
        %1303 = vmatprep.subr.mxu0 0.0
        %1304 = vmatpush1.msra.mxu0 0.0
        %1305 = vmatprep.subr.mxu0 0.0
        %1306 = vmatpush1.msra.mxu0 0.0
        %1307 = vmatprep.subr.mxu0 0.0
        %1308 = vmatpush1.msra.mxu0 0.0
        %1309 = vmatprep.subr.mxu0 0.0
        %1310 = vmatpush1.msra.mxu0 0.0
        %1311 = vmatprep.subr.mxu0 0.0
        %1312 = vmatpush1.msra.mxu0 0.0
        %1313 = vmatprep.subr.mxu0 0.0
        %1314 = vmatpush1.msra.mxu0 0.0
        %1315 = vmatprep.subr.mxu0 0.0
        %1316 = vmatpush1.msra.mxu0 0.0
        %1317 = vmatprep.mubr.f32.mxu0 0.0
        %1318 = vmatmul.mubr.f32.gmra.mrb[0].mxu0 %v1251
        %v1319 = vpop.f32.mrb[0].mxu0
        %v1320 = vadd.f32 0.0, %v1319
        %v1321 = vpop.f32.mrb[0].mxu0
        %1322 = vdwg.mxu0
        %1323 = vrot.lane.b32.xlu0 %v330, 104
        %v1324 = vpop.permute.xlu0 %1323
        %1325 = vrot.lane.b32.xlu0 %v322, 72
        %v1326 = vpop.permute.xlu0 %1325
        %v1327 = vsel %vm335, %v1324, 0
        %v1329 = vsel %vm335, %v1326, 0
        %1331 = vmatprep.subr.mxu0 0.0
        %1332 = vmatpush1.xpose.msra.mxu0 %v1329
        %1333 = vmatprep.subr.mxu0 0.0
        %1334 = vmatpush1.xpose.msra.mxu0 0.0
        %1335 = vmatprep.subr.mxu0 0.0
        %1336 = vmatpush1.xpose.msra.mxu0 0.0
        %1337 = vmatprep.subr.mxu0 0.0
        %1338 = vmatpush1.xpose.msra.mxu0 0.0
        %1339 = vmatprep.subr.mxu0 0.0
        %1340 = vmatpush1.xpose.msra.mxu0 0.0
        %1341 = vmatprep.subr.mxu0 0.0
        %1342 = vmatpush1.xpose.msra.mxu0 0.0
        %1343 = vmatprep.subr.mxu0 0.0
        %1344 = vmatpush1.xpose.msra.mxu0 0.0
        %1345 = vmatprep.subr.mxu0 0.0
        %1346 = vmatpush1.xpose.msra.mxu0 0.0
        %1347 = vmatprep.subr.mxu0 0.0
        %1348 = vmatpush1.xpose.msra.mxu0 0.0
        %1349 = vmatprep.subr.mxu0 0.0
        %1350 = vmatpush1.xpose.msra.mxu0 0.0
        %1351 = vmatprep.subr.mxu0 0.0
        %1352 = vmatpush1.xpose.msra.mxu0 0.0
        %1353 = vmatprep.subr.mxu0 0.0
        %1354 = vmatpush1.xpose.msra.mxu0 0.0
        %1355 = vmatprep.subr.mxu0 0.0
        %1356 = vmatpush1.xpose.msra.mxu0 0.0
        %1357 = vmatprep.subr.mxu0 0.0
        %1358 = vmatpush1.xpose.msra.mxu0 0.0
        %1359 = vmatprep.subr.mxu0 0.0
        %1360 = vmatpush1.xpose.msra.mxu0 0.0
        %1361 = vmatprep.subr.mxu0 0.0
        %1362 = vmatpush1.xpose.msra.mxu0 0.0
        %1363 = vmatprep.subr.mxu0 0.0
        %1364 = vmatpush1.xpose.msra.mxu0 0.0
        %1365 = vmatprep.subr.mxu0 0.0
        %1366 = vmatpush1.xpose.msra.mxu0 0.0
        %1367 = vmatprep.subr.mxu0 0.0
        %1368 = vmatpush1.xpose.msra.mxu0 0.0
        %1369 = vmatprep.subr.mxu0 0.0
        %1370 = vmatpush1.xpose.msra.mxu0 0.0
        %1371 = vmatprep.subr.mxu0 0.0
        %1372 = vmatpush1.xpose.msra.mxu0 0.0
        %1373 = vmatprep.subr.mxu0 0.0
        %1374 = vmatpush1.xpose.msra.mxu0 0.0
        %1375 = vmatprep.subr.mxu0 0.0
        %1376 = vmatpush1.xpose.msra.mxu0 0.0
        %1377 = vmatprep.subr.mxu0 0.0
        %1378 = vmatpush1.xpose.msra.mxu0 0.0
        %1379 = vmatprep.subr.mxu0 0.0
        %1380 = vmatpush1.xpose.msra.mxu0 0.0
        %1381 = vmatprep.subr.mxu0 0.0
        %1382 = vmatpush1.xpose.msra.mxu0 0.0
        %1383 = vmatprep.subr.mxu0 0.0
        %1384 = vmatpush1.xpose.msra.mxu0 0.0
        %1385 = vmatprep.subr.mxu0 0.0
        %1386 = vmatpush1.xpose.msra.mxu0 0.0
        %1387 = vmatprep.subr.mxu0 0.0
        %1388 = vmatpush1.xpose.msra.mxu0 0.0
        %1389 = vmatprep.subr.mxu0 0.0
        %1390 = vmatpush1.xpose.msra.mxu0 0.0
        %1391 = vmatprep.subr.mxu0 0.0
        %1392 = vmatpush1.xpose.msra.mxu0 0.0
        %1393 = vmatprep.subr.mxu0 0.0
        %1394 = vmatpush1.xpose.msra.mxu0 0.0
        %1395 = vmatprep.mubr.f32.mxu0 0.0
        %1396 = vmatmul.mubr.f32.gmra.mrb[0].mxu0 %v1327
        %v1397 = vpop.f32.mrb[0].mxu0
        %v1398 = vadd.f32 0.0, %v1397
        %v1399 = vpop.f32.mrb[0].mxu0
        %1400 = vdwg.mxu0
        %1401 = vrot.lane.b32.xlu0 %v331, 104
        %v1402 = vpop.permute.xlu0 %1401
        %1403 = vrot.lane.b32.xlu0 %v327, 72
        %v1404 = vpop.permute.xlu0 %1403
        %v1405 = vsel %vm335, %v1402, 0
        %v1407 = vsel %vm335, %v1404, 0
        %1409 = vmatprep.subr.mxu0 0.0
        %1410 = vmatpush1.xpose.msra.mxu0 %v1407
        %1411 = vmatprep.subr.mxu0 0.0
        %1412 = vmatpush1.xpose.msra.mxu0 0.0
        %1413 = vmatprep.subr.mxu0 0.0
        %1414 = vmatpush1.xpose.msra.mxu0 0.0
        %1415 = vmatprep.subr.mxu0 0.0
        %1416 = vmatpush1.xpose.msra.mxu0 0.0
        %1417 = vmatprep.subr.mxu0 0.0
        %1418 = vmatpush1.xpose.msra.mxu0 0.0
        %1419 = vmatprep.subr.mxu0 0.0
        %1420 = vmatpush1.xpose.msra.mxu0 0.0
        %1421 = vmatprep.subr.mxu0 0.0
        %1422 = vmatpush1.xpose.msra.mxu0 0.0
        %1423 = vmatprep.subr.mxu0 0.0
        %1424 = vmatpush1.xpose.msra.mxu0 0.0
        %1425 = vmatprep.subr.mxu0 0.0
        %1426 = vmatpush1.xpose.msra.mxu0 0.0
        %1427 = vmatprep.subr.mxu0 0.0
        %1428 = vmatpush1.xpose.msra.mxu0 0.0
        %1429 = vmatprep.subr.mxu0 0.0
        %1430 = vmatpush1.xpose.msra.mxu0 0.0
        %1431 = vmatprep.subr.mxu0 0.0
        %1432 = vmatpush1.xpose.msra.mxu0 0.0
        %1433 = vmatprep.subr.mxu0 0.0
        %1434 = vmatpush1.xpose.msra.mxu0 0.0
        %1435 = vmatprep.subr.mxu0 0.0
        %1436 = vmatpush1.xpose.msra.mxu0 0.0
        %1437 = vmatprep.subr.mxu0 0.0
        %1438 = vmatpush1.xpose.msra.mxu0 0.0
        %1439 = vmatprep.subr.mxu0 0.0
        %1440 = vmatpush1.xpose.msra.mxu0 0.0
        %1441 = vmatprep.subr.mxu0 0.0
        %1442 = vmatpush1.xpose.msra.mxu0 0.0
        %1443 = vmatprep.subr.mxu0 0.0
        %1444 = vmatpush1.xpose.msra.mxu0 0.0
        %1445 = vmatprep.subr.mxu0 0.0
        %1446 = vmatpush1.xpose.msra.mxu0 0.0
        %1447 = vmatprep.subr.mxu0 0.0
        %1448 = vmatpush1.xpose.msra.mxu0 0.0
        %1449 = vmatprep.subr.mxu0 0.0
        %1450 = vmatpush1.xpose.msra.mxu0 0.0
        %1451 = vmatprep.subr.mxu0 0.0
        %1452 = vmatpush1.xpose.msra.mxu0 0.0
        %1453 = vmatprep.subr.mxu0 0.0
        %1454 = vmatpush1.xpose.msra.mxu0 0.0
        %1455 = vmatprep.subr.mxu0 0.0
        %1456 = vmatpush1.xpose.msra.mxu0 0.0
        %1457 = vmatprep.subr.mxu0 0.0
        %1458 = vmatpush1.xpose.msra.mxu0 0.0
        %1459 = vmatprep.subr.mxu0 0.0
        %1460 = vmatpush1.xpose.msra.mxu0 0.0
        %1461 = vmatprep.subr.mxu0 0.0
        %1462 = vmatpush1.xpose.msra.mxu0 0.0
        %1463 = vmatprep.subr.mxu0 0.0
        %1464 = vmatpush1.xpose.msra.mxu0 0.0
        %1465 = vmatprep.subr.mxu0 0.0
        %1466 = vmatpush1.xpose.msra.mxu0 0.0
        %1467 = vmatprep.subr.mxu0 0.0
        %1468 = vmatpush1.xpose.msra.mxu0 0.0
        %1469 = vmatprep.subr.mxu0 0.0
        %1470 = vmatpush1.xpose.msra.mxu0 0.0
        %1471 = vmatprep.subr.mxu0 0.0
        %1472 = vmatpush1.xpose.msra.mxu0 0.0
        %1473 = vmatprep.mubr.f32.mxu0 0.0
        %1474 = vmatmul.mubr.f32.gmra.mrb[0].mxu0 %v1405
        %v1475 = vpop.f32.mrb[0].mxu0
        %v1476 = vadd.f32 0.0, %v1475
        %v1477 = vpop.f32.mrb[0].mxu0
        %1478 = vdwg.mxu0
        %v1479 = vsel %vm335, %v1398, -inf
        %1480 = vmax.xlane.f32.xlu0 %v1479
        %v1481 = vpop.xlane.xlu0 %1480
        %v1482 = vsel %vm335, %v1476, -inf
        %1483 = vmax.xlane.f32.xlu0 %v1482
        %v1484 = vpop.xlane.xlu0 %1483
        %v1485 = vsub.f32 %v1398, %v1481
        %v1486 = vsub.f32 %v1476, %v1484
        %v1487 = vmul.f32 %v1485, 1.442695
        %v1488 = vpow.pop %v1487
        %v1489 = vmul.f32 %v1486, 1.442695
        %v1490 = vpow.pop %v1489
        %v1491 = vsel %vm335, %v1488, 0.0
        %1492 = vadd.xlane.f32.xlu0 %v1491
        %v1493 = vpop.xlane.xlu0 %1492
        %v1494 = vsel %vm335, %v1490, 0.0
        %1495 = vadd.xlane.f32.xlu0 %v1494
        %v1496 = vpop.xlane.xlu0 %1495
        %v1497 = vrcp.pop %v1493
        %v1498 = vmul.f32 %v1488, %v1497
        %v1499 = vrcp.pop %v1496
        %v1500 = vmul.f32 %v1490, %v1499
        %1501 = vrot.lane.b32.xlu0 %v322, 40
        %v1502 = vpop.permute.xlu0 %1501
        %v1505 = vsel %vm335, %v1498, 0
        %1507 = vmatprep.subr.mxu0 0.0
        %1508 = vmatpush1.msra.mxu0 %v1502
        %1509 = vmatprep.subr.mxu0 0.0
        %1510 = vmatpush1.msra.mxu0 0.0
        %1511 = vmatprep.subr.mxu0 0.0
        %1512 = vmatpush1.msra.mxu0 0.0
        %1513 = vmatprep.subr.mxu0 0.0
        %1514 = vmatpush1.msra.mxu0 0.0
        %1515 = vmatprep.subr.mxu0 0.0
        %1516 = vmatpush1.msra.mxu0 0.0
        %1517 = vmatprep.subr.mxu0 0.0
        %1518 = vmatpush1.msra.mxu0 0.0
        %1519 = vmatprep.subr.mxu0 0.0
        %1520 = vmatpush1.msra.mxu0 0.0
        %1521 = vmatprep.subr.mxu0 0.0
        %1522 = vmatpush1.msra.mxu0 0.0
        %1523 = vmatprep.subr.mxu0 0.0
        %1524 = vmatpush1.msra.mxu0 0.0
        %1525 = vmatprep.subr.mxu0 0.0
        %1526 = vmatpush1.msra.mxu0 0.0
        %1527 = vmatprep.subr.mxu0 0.0
        %1528 = vmatpush1.msra.mxu0 0.0
        %1529 = vmatprep.subr.mxu0 0.0
        %1530 = vmatpush1.msra.mxu0 0.0
        %1531 = vmatprep.subr.mxu0 0.0
        %1532 = vmatpush1.msra.mxu0 0.0
        %1533 = vmatprep.subr.mxu0 0.0
        %1534 = vmatpush1.msra.mxu0 0.0
        %1535 = vmatprep.subr.mxu0 0.0
        %1536 = vmatpush1.msra.mxu0 0.0
        %1537 = vmatprep.subr.mxu0 0.0
        %1538 = vmatpush1.msra.mxu0 0.0
        %1539 = vmatprep.subr.mxu0 0.0
        %1540 = vmatpush1.msra.mxu0 0.0
        %1541 = vmatprep.subr.mxu0 0.0
        %1542 = vmatpush1.msra.mxu0 0.0
        %1543 = vmatprep.subr.mxu0 0.0
        %1544 = vmatpush1.msra.mxu0 0.0
        %1545 = vmatprep.subr.mxu0 0.0
        %1546 = vmatpush1.msra.mxu0 0.0
        %1547 = vmatprep.subr.mxu0 0.0
        %1548 = vmatpush1.msra.mxu0 0.0
        %1549 = vmatprep.subr.mxu0 0.0
        %1550 = vmatpush1.msra.mxu0 0.0
        %1551 = vmatprep.subr.mxu0 0.0
        %1552 = vmatpush1.msra.mxu0 0.0
        %1553 = vmatprep.subr.mxu0 0.0
        %1554 = vmatpush1.msra.mxu0 0.0
        %1555 = vmatprep.subr.mxu0 0.0
        %1556 = vmatpush1.msra.mxu0 0.0
        %1557 = vmatprep.subr.mxu0 0.0
        %1558 = vmatpush1.msra.mxu0 0.0
        %1559 = vmatprep.subr.mxu0 0.0
        %1560 = vmatpush1.msra.mxu0 0.0
        %1561 = vmatprep.subr.mxu0 0.0
        %1562 = vmatpush1.msra.mxu0 0.0
        %1563 = vmatprep.subr.mxu0 0.0
        %1564 = vmatpush1.msra.mxu0 0.0
        %1565 = vmatprep.subr.mxu0 0.0
        %1566 = vmatpush1.msra.mxu0 0.0
        %1567 = vmatprep.subr.mxu0 0.0
        %1568 = vmatpush1.msra.mxu0 0.0
        %1569 = vmatprep.subr.mxu0 0.0
        %1570 = vmatpush1.msra.mxu0 0.0
        %1571 = vmatprep.mubr.f32.mxu0 0.0
        %1572 = vmatmul.mubr.f32.gmra.mrb[0].mxu0 %v1505
        %v1573 = vpop.f32.mrb[0].mxu0
        %v1574 = vadd.f32 0.0, %v1573
        %v1575 = vpop.f32.mrb[0].mxu0
        %1576 = vdwg.mxu0
        %1577 = vrot.lane.b32.xlu0 %v327, 40
        %v1578 = vpop.permute.xlu0 %1577
        %v1581 = vsel %vm335, %v1500, 0
        %1583 = vmatprep.subr.mxu0 0.0
        %1584 = vmatpush1.msra.mxu0 %v1578
        %1585 = vmatprep.subr.mxu0 0.0
        %1586 = vmatpush1.msra.mxu0 0.0
        %1587 = vmatprep.subr.mxu0 0.0
        %1588 = vmatpush1.msra.mxu0 0.0
        %1589 = vmatprep.subr.mxu0 0.0
        %1590 = vmatpush1.msra.mxu0 0.0
        %1591 = vmatprep.subr.mxu0 0.0
        %1592 = vmatpush1.msra.mxu0 0.0
        %1593 = vmatprep.subr.mxu0 0.0
        %1594 = vmatpush1.msra.mxu0 0.0
        %1595 = vmatprep.subr.mxu0 0.0
        %1596 = vmatpush1.msra.mxu0 0.0
        %1597 = vmatprep.subr.mxu0 0.0
        %1598 = vmatpush1.msra.mxu0 0.0
        %1599 = vmatprep.subr.mxu0 0.0
        %1600 = vmatpush1.msra.mxu0 0.0
        %1601 = vmatprep.subr.mxu0 0.0
        %1602 = vmatpush1.msra.mxu0 0.0
        %1603 = vmatprep.subr.mxu0 0.0
        %1604 = vmatpush1.msra.mxu0 0.0
        %1605 = vmatprep.subr.mxu0 0.0
        %1606 = vmatpush1.msra.mxu0 0.0
        %1607 = vmatprep.subr.mxu0 0.0
        %1608 = vmatpush1.msra.mxu0 0.0
        %1609 = vmatprep.subr.mxu0 0.0
        %1610 = vmatpush1.msra.mxu0 0.0
        %1611 = vmatprep.subr.mxu0 0.0
        %1612 = vmatpush1.msra.mxu0 0.0
        %1613 = vmatprep.subr.mxu0 0.0
        %1614 = vmatpush1.msra.mxu0 0.0
        %1615 = vmatprep.subr.mxu0 0.0
        %1616 = vmatpush1.msra.mxu0 0.0
        %1617 = vmatprep.subr.mxu0 0.0
        %1618 = vmatpush1.msra.mxu0 0.0
        %1619 = vmatprep.subr.mxu0 0.0
        %1620 = vmatpush1.msra.mxu0 0.0
        %1621 = vmatprep.subr.mxu0 0.0
        %1622 = vmatpush1.msra.mxu0 0.0
        %1623 = vmatprep.subr.mxu0 0.0
        %1624 = vmatpush1.msra.mxu0 0.0
        %1625 = vmatprep.subr.mxu0 0.0
        %1626 = vmatpush1.msra.mxu0 0.0
        %1627 = vmatprep.subr.mxu0 0.0
        %1628 = vmatpush1.msra.mxu0 0.0
        %1629 = vmatprep.subr.mxu0 0.0
        %1630 = vmatpush1.msra.mxu0 0.0
        %1631 = vmatprep.subr.mxu0 0.0
        %1632 = vmatpush1.msra.mxu0 0.0
        %1633 = vmatprep.subr.mxu0 0.0
        %1634 = vmatpush1.msra.mxu0 0.0
        %1635 = vmatprep.subr.mxu0 0.0
        %1636 = vmatpush1.msra.mxu0 0.0
        %1637 = vmatprep.subr.mxu0 0.0
        %1638 = vmatpush1.msra.mxu0 0.0
        %1639 = vmatprep.subr.mxu0 0.0
        %1640 = vmatpush1.msra.mxu0 0.0
        %1641 = vmatprep.subr.mxu0 0.0
        %1642 = vmatpush1.msra.mxu0 0.0
        %1643 = vmatprep.subr.mxu0 0.0
        %1644 = vmatpush1.msra.mxu0 0.0
        %1645 = vmatprep.subr.mxu0 0.0
        %1646 = vmatpush1.msra.mxu0 0.0
        %1647 = vmatprep.mubr.f32.mxu0 0.0
        %1648 = vmatmul.mubr.f32.gmra.mrb[0].mxu0 %v1581
        %v1649 = vpop.f32.mrb[0].mxu0
        %v1650 = vadd.f32 0.0, %v1649
        %v1651 = vpop.f32.mrb[0].mxu0
        %1652 = vdwg.mxu0
        %1655 = vrot.lane.b32.xlu0 %v914, 8
        %v1656 = vpop.permute.xlu0 %1655
        %1657 = vrot.lane.b32.xlu0 %v990, 8
        %v1658 = vpop.permute.xlu0 %1657
        %1663 = vrot.lane.b32.xlu0 %v1244, 16
        %v1664 = vpop.permute.xlu0 %1663
        %1665 = vrot.lane.b32.xlu0 %v1320, 16
        %v1666 = vpop.permute.xlu0 %1665
        %1671 = vrot.lane.b32.xlu0 %v1574, 24
        %v1672 = vpop.permute.xlu0 %1671
        %1673 = vrot.lane.b32.xlu0 %v1650, 24
        %v1674 = vpop.permute.xlu0 %1673
        %v1677 = vsel %vm335, %v584, %v1656
        %v1678 = vsel %vm335, %v660, %v1658
        %vm1679 = vcmask 130048
        %v1680 = vsel %vm1679, %v1677, %v1664
        %v1681 = vsel %vm1679, %v1678, %v1666
        %vm1682 = vcmask 195584
        %v1683 = vsel %vm1682, %v1680, %v1672
        %v1684 = vsel %vm1682, %v1681, %v1674
        %v1686 = vsel %vm248, %v1683, 0
        %v1689 = vsel %vm248, %v1684, 0
        %1691 = vmatprep.subr.mxu0 0.0
        %1692 = vmatpush1.msra.mxu0 %v244
        %1693 = vmatprep.subr.mxu0 0.0
        %1694 = vmatpush1.msra.mxu0 %v245
        %1695 = vmatprep.subr.mxu0 0.0
        %1696 = vmatpush1.msra.mxu0 %v246
        %1697 = vmatprep.subr.mxu0 0.0
        %1698 = vmatpush1.msra.mxu0 %v247
        %1699 = vmatprep.subr.mxu0 0.0
        %1700 = vmatpush1.msra.mxu0 0.0
        %1701 = vmatprep.subr.mxu0 0.0
        %1702 = vmatpush1.msra.mxu0 0.0
        %1703 = vmatprep.subr.mxu0 0.0
        %1704 = vmatpush1.msra.mxu0 0.0
        %1705 = vmatprep.subr.mxu0 0.0
        %1706 = vmatpush1.msra.mxu0 0.0
        %1707 = vmatprep.subr.mxu0 0.0
        %1708 = vmatpush1.msra.mxu0 0.0
        %1709 = vmatprep.subr.mxu0 0.0
        %1710 = vmatpush1.msra.mxu0 0.0
        %1711 = vmatprep.subr.mxu0 0.0
        %1712 = vmatpush1.msra.mxu0 0.0
        %1713 = vmatprep.subr.mxu0 0.0
        %1714 = vmatpush1.msra.mxu0 0.0
        %1715 = vmatprep.subr.mxu0 0.0
        %1716 = vmatpush1.msra.mxu0 0.0
        %1717 = vmatprep.subr.mxu0 0.0
        %1718 = vmatpush1.msra.mxu0 0.0
        %1719 = vmatprep.subr.mxu0 0.0
        %1720 = vmatpush1.msra.mxu0 0.0
        %1721 = vmatprep.subr.mxu0 0.0
        %1722 = vmatpush1.msra.mxu0 0.0
        %1723 = vmatprep.subr.mxu0 0.0
        %1724 = vmatpush1.msra.mxu0 0.0
        %1725 = vmatprep.subr.mxu0 0.0
        %1726 = vmatpush1.msra.mxu0 0.0
        %1727 = vmatprep.subr.mxu0 0.0
        %1728 = vmatpush1.msra.mxu0 0.0
        %1729 = vmatprep.subr.mxu0 0.0
        %1730 = vmatpush1.msra.mxu0 0.0
        %1731 = vmatprep.subr.mxu0 0.0
        %1732 = vmatpush1.msra.mxu0 0.0
        %1733 = vmatprep.subr.mxu0 0.0
        %1734 = vmatpush1.msra.mxu0 0.0
        %1735 = vmatprep.subr.mxu0 0.0
        %1736 = vmatpush1.msra.mxu0 0.0
        %1737 = vmatprep.subr.mxu0 0.0
        %1738 = vmatpush1.msra.mxu0 0.0
        %1739 = vmatprep.subr.mxu0 0.0
        %1740 = vmatpush1.msra.mxu0 0.0
        %1741 = vmatprep.subr.mxu0 0.0
        %1742 = vmatpush1.msra.mxu0 0.0
        %1743 = vmatprep.subr.mxu0 0.0
        %1744 = vmatpush1.msra.mxu0 0.0
        %1745 = vmatprep.subr.mxu0 0.0
        %1746 = vmatpush1.msra.mxu0 0.0
        %1747 = vmatprep.subr.mxu0 0.0
        %1748 = vmatpush1.msra.mxu0 0.0
        %1749 = vmatprep.subr.mxu0 0.0
        %1750 = vmatpush1.msra.mxu0 0.0
        %1751 = vmatprep.subr.mxu0 0.0
        %1752 = vmatpush1.msra.mxu0 0.0
        %1753 = vmatprep.subr.mxu0 0.0
        %1754 = vmatpush1.msra.mxu0 0.0
        %1755 = vmatprep.mubr.f32.mxu0 0.0
        %1756 = vmatmul.mubr.f32.gmra.mrb[0].mxu0 %v1686
        %v1757 = vpop.f32.mrb[0].mxu0
        %v1758 = vadd.f32 0.0, %v1757
        %v1759 = vpop.f32.mrb[0].mxu0
        %1760 = vmatprep.mubr.f32.mxu0 0.0
        %1761 = vmatmul.mubr.f32.gmra.mrb[0].mxu0 %v1689
        %v1762 = vpop.f32.mrb[0].mxu0
        %v1763 = vadd.f32 0.0, %v1762
        %v1764 = vpop.f32.mrb[0].mxu0
        %1765 = vdwg.mxu0
        %1766 = vst.msk [vmem:[#allocation2] sm:$0xff] %vm248, %v1758
        %1767 = vst.msk [vmem:[#allocation2 + $0x8] sm:$0xff] %vm248, %v1763
        %p1768 = scmp.eq.s32.totalorder %s19, 1
        // Predicated region
        $region49: #{encoder_forward.1} parent=31 // pred_check
          %p1769 = pneg %p1768
        $region50: #{encoder_forward.1} parent=31 // pred_check_branch
          %1771 = sbr.rel (%p1769) target = $region52
        $region51: #{encoder_forward.1} parent=31 // pred_region
          %1772 = vst.msk [vmem:[#allocation9] sm:$0xff] %vm248, %v1758
          %1773 = vst.msk [vmem:[#allocation9 + $0x8] sm:$0xff] %vm248, %v1763
        $region52: #{encoder_forward.1} parent=31 // pred_fallthru
          _
        // Predicated region
        $region53: #{encoder_forward.1} parent=31 // pred_check
          %p1774 = pneg %p105
        $region54: #{encoder_forward.1} parent=31 // pred_check_branch
          %1776 = sbr.rel (%p1774) target = $region56
        $region55: #{encoder_forward.1} parent=31 // pred_region
          %s1778 = ssub.s32 256, 256
          %1779 = vsyncadd [#allocation5], %s1778
          %s1780 = sshll.u32 [#allocation9], 4
          %s1781 = int_to_ptr.vmem [resolvable:$true] %s1780
          %1786 = dma.vmem_to_hbm [thread:$0]  %s1781, 256, %s3, [#allocation5], 128, 128, 8
        $region56: #{encoder_forward.1} parent=31 // pred_fallthru
          _
        // Predicated region
        $region57: #{encoder_forward.1} parent=31 // pred_check
          %p1787 = pneg %p105
        $region58: #{encoder_forward.1} parent=31 // pred_check_branch
          %1789 = sbr.rel (%p1787) target = $region60
        $region59: #{encoder_forward.1} parent=31 // pred_region
          %1790 = dma.done [#allocation5], 256
        $region60: #{encoder_forward.1} parent=31 // pred_fallthru
          _
      $region32: #{encoder_forward.1} parent=5 // pred_fallthru
        _
      %p1791 = scmp.le.s32.totalorder 2, %s14
      // Predicated region
      $region61: #{encoder_forward.1} parent=5 // pred_check
        %p1792 = pneg %p1791
      $region62: #{encoder_forward.1} parent=5 // pred_check_branch
        %1794 = sbr.rel (%p1792) target = $region64
      $region63: #{encoder_forward.1} parent=5 // pred_region
        %s1795 = ssub.s32 %s14, 2
      $region64: #{encoder_forward.1} parent=5 // pred_fallthru
        _
    $region6: #{encoder_forward.1} parent=1 // loop_footer
      %s18 = sadd.s32 1, %s14
    $region7: #{encoder_forward.1} parent=1 // loop_footer_branch
      %13 = sbr.rel target = $region3
    $region8: #{encoder_forward.1} parent=1 // loop_exit
      _
    %1796 = vsyncpa [#allocation4], 1
    %s1797 = scalar_lea.sflag [#allocation4], 1
    %1798 = vsyncpa %s1797, 1
    %1799 = vsyncpa [#allocation7], 1
    %s1800 = scalar_lea.sflag [#allocation7], 1
    %1801 = vsyncpa %s1800, 1
    %1802 = vsyncpa [#allocation5], 1
    %s1803 = scalar_lea.sflag [#allocation5], 1
    %1804 = vsyncpa %s1803, 1

</llo_original>
